<compile_context>
chip_gen: v6e
topology: v6e:2x2x1
jax: 0.10.0
libtpu: 0.0.40
codegen_flags: <defaults>
</compile_context>

<pallas_src>
import functools

import jax
import jax.numpy as jnp
from jax.experimental import pallas as pl
from jax.experimental.pallas import tpu as pltpu


def _round_up(x, m):
    return (x + m - 1) // m * m


def _vmem_capacity_bytes():
    try:
        info = pltpu.get_tpu_info()
        cap = int(getattr(info, "vmem_capacity_bytes", 0) or 0)
        if cap > 0:
            return cap
    except Exception:
        pass
    return 64 * 1024 * 1024          # conservative default (v7x per-core VMEM)


def _pick_row_tile(H1, Wp, K1P, CP, vmem_cap, max_rows=1024):
    """Largest divisor TR of H1 whose estimated VMEM footprint fits the budget."""
    budget = int(0.40 * vmem_cap)

    def est(tr):
        rows_out = tr * Wp
        rows_h1 = rows_out + 2 * Wp
        rows_a = rows_out + 3 * Wp
        return (2 * rows_a * K1P * 2                 # A tile, bf16, double-buffered
                + 2 * rows_out * CP * 2              # out tile, bf16, double-buffered
                + (rows_h1 + 8) * 3 * CP * 2         # kw-folded conv2 LHS scratch
                + rows_out * CP * 4                  # shortcut staging (f32)
                + 2 * rows_h1 * 2 * CP * 4           # headroom: conv1 f32 result
                + 2 * (2 * K1P * 2 * CP * 2 + 9 * CP * CP * 2))   # weights

    best = 1
    for tr in range(1, H1 + 1):
        if H1 % tr or tr * Wp > max_rows:
            continue
        if est(tr) <= budget:
            best = tr
    return best


# ---------------------------------------------------------------------------
# Fused kernel: conv1(+shortcut) -> LReLU -> conv2 -> LReLU -> epilogue
# ---------------------------------------------------------------------------
def _fused_resD_kernel(a_ref,                    # (1, 1, rows_a, K1P) bf16   (auto-pipelined)
                       w1_ref,                   # (2, K1P, 2*CP)     bf16   [conv1 | shortcut]
                       w2_ref,                   # (3, 3*CP, CP)      bf16   kw-folded conv2
                       bs_ref,                   # (1, CP)            f32
                       g_ref,                    # (1,)               f32    SMEM
                       o_ref,                    # (1, rows_out, CP)  bf16
                       lhs_ref,                  # (rows_h1+8, 3*CP)  bf16   scratch
                       sc_ref,                   # (rows_out, CP)     f32    scratch
                       *, rows_out, rows_h1, Wp, CP, slope):
    r = pl.program_id(1)

    # ---- conv1 (4x4 / s2 / p1) fused with the pooled 1x1 shortcut ----------
    # Two shifted matmuls over the flattened (h1-row, col) space; the extra CP
    # output lanes carry avg_pool2d(x,2) @ Ws (the /4 and the pool-tap
    # selection are folded into the weights).
    hs = jnp.dot(a_ref[0, 0, 0:rows_h1, :], w1_ref[0],
                 preferred_element_type=jnp.float32)
    hs = hs + jnp.dot(a_ref[0, 0, Wp:Wp + rows_h1, :], w1_ref[1],
                      preferred_element_type=jnp.float32)

    h1 = hs[:, :CP]
    lhs_ref[0:rows_h1, 0:CP] = jnp.where(h1 >= 0., h1, slope * h1).astype(lhs_ref.dtype)
    # shortcut values for the interior rows only (h1 layout is shifted by Wp+1
    # relative to the output layout).
    sc_ref[...] = hs[Wp + 1:Wp + 1 + rows_out, CP:]

    # ---- conv2's vertical zero padding (h1 rows -1 and H1 are zero) --------
    @pl.when(r == 0)
    def _():
        lhs_ref[0:Wp, 0:CP] = jnp.zeros((Wp, CP), lhs_ref.dtype)

    @pl.when(r == pl.num_programs(1) - 1)
    def _():
        lhs_ref[rows_out + Wp:rows_out + 2 * Wp, 0:CP] = jnp.zeros((Wp, CP), lhs_ref.dtype)

    # defined values for the +1 / +2 shifted reads below
    lhs_ref[rows_h1:rows_h1 + 8, 0:CP] = jnp.zeros((8, CP), lhs_ref.dtype)

    # ---- kw-folded conv2 LHS: lane block kw = h1 shifted by kw rows ---------
    lhs_ref[0:rows_h1, CP:2 * CP] = lhs_ref[1:rows_h1 + 1, 0:CP]
    lhs_ref[0:rows_h1, 2 * CP:3 * CP] = lhs_ref[2:rows_h1 + 2, 0:CP]

    # ---- conv2 (3x3 / s1 / p1): 3 matmuls with K = 3*CP, 8-aligned offsets --
    acc = jnp.dot(lhs_ref[0:rows_out, :], w2_ref[0],
                  preferred_element_type=jnp.float32)
    acc = acc + jnp.dot(lhs_ref[Wp:Wp + rows_out, :], w2_ref[1],
                        preferred_element_type=jnp.float32)
    acc = acc + jnp.dot(lhs_ref[2 * Wp:2 * Wp + rows_out, :], w2_ref[2],
                        preferred_element_type=jnp.float32)
    res = jnp.where(acc >= 0., acc, slope * acc)

    # ---- epilogue: out = shortcut + bias + gamma * residual ------------------
    o_ref[0] = (sc_ref[...] + bs_ref[...] + g_ref[0] * res).astype(o_ref.dtype)


# ---------------------------------------------------------------------------
# Wrapper (NCHW in / NCHW out, NHWC + lane-dense padded layout inside)
# ---------------------------------------------------------------------------
def resD_forward(x_nchw, params, downsample=True):
    if not downsample:
        # TODO(synk): downsample=False is shape-inconsistent in the reference
        # forward (residual halves HxW, shortcut does not); not implemented.
        raise NotImplementedError("resD Pallas kernel supports downsample=True only")

    N, fin, H, W = x_nchw.shape
    fout = params["w_r1"].shape[0]
    learned_shortcut = (fin != fout)
    assert H % 2 == 0 and W % 2 == 0, "H and W must be even (4x4/s2 conv + 2x2 pool)"

    H1, W1 = H // 2, W // 2
    Wp = _round_up(W1 + 2, 8)          # conv2-padded width, 8-aligned tap offsets
    CP = _round_up(fout, 128)          # lane-dense output channels
    K1 = 8 * fin                       # 2 input rows x 4 kw x fin
    K1P = _round_up(K1, 128)

    vmem_cap = _vmem_capacity_bytes()
    TR = _pick_row_tile(H1, Wp, K1P, CP, vmem_cap)
    R = H1 // TR
    rows_out = TR * Wp                 # output rows per grid step
    rows_h1 = rows_out + 2 * Wp        # h1 rows per step (incl. +-1 conv2 halo)
    rows_a = rows_out + 3 * Wp         # A rows per step (conv1 needs one more)

    # ---- 2x4-window im2col for conv1 (stride 2): channels = (dh, kw, cin) ---
    x = jnp.transpose(x_nchw, (0, 2, 3, 1)).astype(jnp.bfloat16)      # NHWC bf16
    xp = jnp.pad(x, ((0, 0), (1, 1), (1, 1), (0, 0)))
    cols = [xp[:, dh:dh + 2 * (H1 + 1):2, kw:kw + 2 * W1:2, :]
            for dh in range(2) for kw in range(4)]
    a = jnp.concatenate(cols, axis=-1)                                # (N,H1+1,W1,8*fin)
    # left/right/top/bottom zero padding reproduces conv2's spatial padding
    # for the columns; vertical halo rows are zeroed in-kernel.
    a = jnp.pad(a, ((0, 0), (1, 1), (1, Wp - W1 - 1), (0, K1P - K1)))
    a = a.reshape(N, (H1 + 3) * Wp, K1P)
    # per-tile copies including the halo rows -> plain auto-pipelined BlockSpec
    a = jnp.stack([a[:, r * rows_out:r * rows_out + rows_a, :] for r in range(R)],
                  axis=1)                                             # (N,R,rows_a,K1P)

    # ---- conv1 weights split into top / bottom input-row pairs --------------
    wkk = jnp.transpose(params["w_r1"].astype(jnp.float32), (2, 3, 1, 0))  # (kh,kw,I,O)
    w_top = wkk[0:2].reshape(K1, fout)
    w_bot = wkk[2:4].reshape(K1, fout)

    # ---- shortcut (avg-pool then 1x1 conv) folded into the conv1 matmul -----
    if learned_shortcut:
        ws = params["w_s"][:, :, 0, 0].astype(jnp.float32).T          # (fin, fout)
        bs = params["b_s"].astype(jnp.float32)
    else:
        ws = jnp.eye(fin, dtype=jnp.float32)
        bs = jnp.zeros((fout,), jnp.float32)
    z = jnp.zeros((2, 4, fin, fout), jnp.float32)
    s_top = z.at[1, 1].set(ws / 4).at[1, 2].set(ws / 4).reshape(K1, fout)
    s_bot = z.at[0, 1].set(ws / 4).at[0, 2].set(ws / 4).reshape(K1, fout)

    def _pad_io(w):
        return jnp.pad(w, ((0, K1P - K1), (0, CP - fout)))

    w1 = jnp.stack(
        [jnp.concatenate([_pad_io(w_top), _pad_io(s_top)], axis=1),
         jnp.concatenate([_pad_io(w_bot), _pad_io(s_bot)], axis=1)],
        axis=0).astype(jnp.bfloat16)                                  # (2, K1P, 2*CP)

    # ---- conv2 weights: kw folded into the contraction dim ------------------
    w2t = jnp.transpose(params["w_r2"].astype(jnp.float32), (2, 3, 1, 0))   # (kh,kw,I,O)
    w2 = jnp.stack(
        [jnp.concatenate([jnp.pad(w2t[kh, kw], ((0, CP - fout), (0, CP - fout)))
                          for kw in range(3)], axis=0)
         for kh in range(3)], axis=0).astype(jnp.bfloat16)            # (3, 3*CP, CP)

    bs_pad = jnp.pad(bs, (0, CP - fout)).reshape(1, CP).astype(jnp.float32)
    g = params["gamma"].astype(jnp.float32).reshape(1)

    grid = (N, R)
    kernel = functools.partial(_fused_resD_kernel, rows_out=rows_out,
                               rows_h1=rows_h1, Wp=Wp, CP=CP, slope=0.2)

    flops = int(N * R * (2 * 2 * rows_h1 * K1P * (2 * CP)
                         + 3 * 2 * rows_out * (3 * CP) * CP))
    bytes_accessed = int(a.size * 2 + N * H1 * Wp * CP * 2
                         + w1.size * 2 + w2.size * 2 + bs_pad.size * 4)

    out = pl.pallas_call(
        kernel,
        out_shape=jax.ShapeDtypeStruct((N, H1 * Wp, CP), jnp.bfloat16),
        grid_spec=pltpu.PrefetchScalarGridSpec(
            num_scalar_prefetch=0,
            grid=grid,
            in_specs=[
                pl.BlockSpec((1, 1, rows_a, K1P), lambda n, r: (n, r, 0, 0)),   # A tile
                pl.BlockSpec((2, K1P, 2 * CP), lambda n, r: (0, 0, 0)),         # w1 (+sc)
                pl.BlockSpec((3, 3 * CP, CP), lambda n, r: (0, 0, 0)),          # w2 folded
                pl.BlockSpec((1, CP), lambda n, r: (0, 0)),                     # bias
                pl.BlockSpec(memory_space=pltpu.MemorySpace.SMEM),              # gamma
            ],
            out_specs=pl.BlockSpec((1, rows_out, CP), lambda n, r: (n, r, 0)),
            scratch_shapes=[
                pltpu.VMEM((rows_h1 + 8, 3 * CP), jnp.bfloat16),   # kw-folded conv2 LHS
                pltpu.VMEM((rows_out, CP), jnp.float32),           # shortcut staging
            ],
        ),
        compiler_params=pltpu.CompilerParams(
            dimension_semantics=("parallel", "parallel"),
            vmem_limit_bytes=int(min(0.9 * vmem_cap, 100 * 1024 * 1024)),
        ),
        cost_estimate=pl.CostEstimate(flops=flops, transcendentals=0,
                                      bytes_accessed=bytes_accessed),
    )(a, w1, w2, bs_pad, g)

    out = out.reshape(N, H1, Wp, CP)[:, :, :W1, :fout].astype(jnp.float32)
    return jnp.transpose(out, (0, 3, 1, 2))                           # back to NCHW


# ---------------------------------------------------------------------------
# Pure-JAX reference (lax convs, NCHW) for a sanity check
# ---------------------------------------------------------------------------
def resD_reference(x_nchw, params, downsample=True, learned_shortcut=True):
    dn = ("NCHW", "OIHW", "NCHW")
    h = jax.lax.conv_general_dilated(x_nchw, params["w_r1"], (2, 2),
                                     [(1, 1), (1, 1)], dimension_numbers=dn)
    h = jnp.where(h >= 0, h, 0.2 * h)
    h = jax.lax.conv_general_dilated(h, params["w_r2"], (1, 1),
                                     [(1, 1), (1, 1)], dimension_numbers=dn)
    r = jnp.where(h >= 0, h, 0.2 * h)
    s = x_nchw
    if learned_shortcut:
        s = jax.lax.conv_general_dilated(x_nchw, params["w_s"], (1, 1),
                                         [(0, 0), (0, 0)], dimension_numbers=dn)
        s = s + params["b_s"][None, :, None, None]
    if downsample:
        n, c, hh, ww = s.shape
        s = s.reshape(n, c, hh // 2, 2, ww // 2, 2).mean(axis=(3, 5))
    return s + params["gamma"][0] * r


# ---------------------------------------------------------------------------
if __name__ == "__main__":
    key = jax.random.PRNGKey(0)
    keys = jax.random.split(key, 6)

    fwd = jax.jit(resD_forward, static_argnames=("downsample",))

    # --- test 1: fin != fout -> learned shortcut ----------------------------
    N, fin, fout, H, W = 2, 4, 8, 16, 16
    x = jax.random.normal(keys[0], (N, fin, H, W), jnp.float32)
    params = {
        "w_r1": 0.1 * jax.random.normal(keys[1], (fout, fin, 4, 4), jnp.float32),
        "w_r2": 0.1 * jax.random.normal(keys[2], (fout, fout, 3, 3), jnp.float32),
        "w_s":  0.1 * jax.random.normal(keys[3], (fout, fin, 1, 1), jnp.float32),
        "b_s":  0.1 * jax.random.normal(keys[4], (fout,), jnp.float32),
        "gamma": jnp.full((1,), 0.5, jnp.float32),   # nonzero so residual is exercised
    }
    out = jax.block_until_ready(fwd(x, params))
    assert out.shape == (N, fout, H // 2, W // 2), out.shape
    ref = resD_reference(x, params, downsample=True, learned_shortcut=True)
    err = float(jnp.max(jnp.abs(out - ref)))
    assert err < 5e-2, f"learned-shortcut mismatch: max abs err = {err}"

    # --- test 2: fin == fout -> identity shortcut ---------------------------
    fin2 = fout2 = 8
    x2 = jax.random.normal(keys[5], (N, fin2, H, W), jnp.float32)
    params2 = {
        "w_r1": 0.1 * jax.random.normal(keys[1], (fout2, fin2, 4, 4), jnp.float32),
        "w_r2": 0.1 * jax.random.normal(keys[2], (fout2, fout2, 3, 3), jnp.float32),
        "w_s":  jnp.zeros((fout2, fin2, 1, 1), jnp.float32),   # unused
        "b_s":  jnp.zeros((fout2,), jnp.float32),              # unused
        "gamma": jnp.full((1,), 0.5, jnp.float32),
    }
    out2 = jax.block_until_ready(fwd(x2, params2))
    ref2 = resD_reference(x2, params2, downsample=True, learned_shortcut=False)
    err2 = float(jnp.max(jnp.abs(out2 - ref2)))
    assert err2 < 5e-2, f"identity-shortcut mismatch: max abs err = {err2}"

    print("KERNEL_OK")
</pallas_src>

<mosaic_0001>
module attributes {stable_mosaic.version = 11 : i64} {
  func.func @_fused_resD_kernel(%arg0: i32, %arg1: i32, %arg2: memref<1x1x176x128xbf16, #tpu.memory_space<vmem>>, %arg3: memref<2x128x256xbf16, #tpu.memory_space<vmem>>, %arg4: memref<3x384x128xbf16, #tpu.memory_space<vmem>>, %arg5: memref<1x128xf32, #tpu.memory_space<vmem>>, %arg6: memref<1xf32, #tpu.memory_space<smem>>, %arg7: memref<1x128x128xbf16, #tpu.memory_space<vmem>>, %arg8: memref<168x384xbf16, #tpu.memory_space<vmem>>, %arg9: memref<128x128xf32, #tpu.memory_space<vmem>>) attributes {dimension_semantics = [#tpu.dimension_semantics<parallel>, #tpu.dimension_semantics<parallel>], iteration_bounds = array<i64: 2, 1>, scalar_prefetch = 0 : i64, scratch_operands = 2 : i64, tpu.core_type = #tpu.core_type<tc>, window_params = [{transform_indices = @transform_0, window_bounds = array<i64: 1, 1, 176, 128>}, {pipeline_mode = #tpu.pipeline_mode<synchronous>, transform_indices = @transform_1, window_bounds = array<i64: 2, 128, 256>}, {pipeline_mode = #tpu.pipeline_mode<synchronous>, transform_indices = @transform_2, window_bounds = array<i64: 3, 384, 128>}, {pipeline_mode = #tpu.pipeline_mode<synchronous>, transform_indices = @transform_3, window_bounds = array<i64: 1, 128>}, {transform_indices = @transform_4, window_bounds = array<i64: 1>}, {transform_indices = @transform_5, window_bounds = array<i64: 1, 128, 128>}]} {
    %c0 = arith.constant 0 : index
    %c0_0 = arith.constant 0 : index
    %c0_1 = arith.constant 0 : index
    %c0_2 = arith.constant 0 : index
    %0 = vector.load %arg2[%c0, %c0_0, %c0_1, %c0_2] : memref<1x1x176x128xbf16, #tpu.memory_space<vmem>>, vector<1x1x160x128xbf16>
    %1 = vector.shape_cast %0 : vector<1x1x160x128xbf16> to vector<160x128xbf16>
    %c0_3 = arith.constant 0 : index
    %c0_4 = arith.constant 0 : index
    %c0_5 = arith.constant 0 : index
    %2 = vector.load %arg3[%c0_3, %c0_4, %c0_5] : memref<2x128x256xbf16, #tpu.memory_space<vmem>>, vector<1x128x256xbf16>
    %3 = vector.shape_cast %2 : vector<1x128x256xbf16> to vector<128x256xbf16>
    %cst = arith.constant dense<0.000000e+00> : vector<160x256xf32>
    %4 = tpu.matmul %1, %3, %cst {dimension_numbers = #tpu.dot_dimension_numbers<[1], [0], [0], [1], [0, 0, 1, 1], [], []>} : vector<160x128xbf16>, vector<128x256xbf16>, vector<160x256xf32> -> vector<160x256xf32>
    %c0_6 = arith.constant 0 : index
    %c0_7 = arith.constant 0 : index
    %c16 = arith.constant 16 : index
    %c0_8 = arith.constant 0 : index
    %5 = vector.load %arg2[%c0_6, %c0_7, %c16, %c0_8] : memref<1x1x176x128xbf16, #tpu.memory_space<vmem>>, vector<1x1x160x128xbf16>
    %6 = vector.shape_cast %5 : vector<1x1x160x128xbf16> to vector<160x128xbf16>
    %c1 = arith.constant 1 : index
    %c0_9 = arith.constant 0 : index
    %c0_10 = arith.constant 0 : index
    %7 = vector.load %arg3[%c1, %c0_9, %c0_10] : memref<2x128x256xbf16, #tpu.memory_space<vmem>>, vector<1x128x256xbf16>
    %8 = vector.shape_cast %7 : vector<1x128x256xbf16> to vector<128x256xbf16>
    %cst_11 = arith.constant dense<0.000000e+00> : vector<160x256xf32>
    %9 = tpu.matmul %6, %8, %cst_11 {dimension_numbers = #tpu.dot_dimension_numbers<[1], [0], [0], [1], [0, 0, 1, 1], [], []>} : vector<160x128xbf16>, vector<128x256xbf16>, vector<160x256xf32> -> vector<160x256xf32>
    %10 = arith.addf %4, %9 : vector<160x256xf32>
    %11 = vector.extract_strided_slice %10 {offsets = [0, 0], sizes = [160, 128], strides = [1, 1]} : vector<160x256xf32> to vector<160x128xf32>
    %cst_12 = arith.constant 0.000000e+00 : f32
    %12 = vector.broadcast %cst_12 : f32 to vector<160x128xf32>
    %13 = arith.cmpf oge, %11, %12 : vector<160x128xf32>
    %cst_13 = arith.constant 2.000000e-01 : f32
    %14 = vector.broadcast %cst_13 : f32 to vector<160x128xf32>
    %15 = arith.mulf %14, %11 : vector<160x128xf32>
    %16 = arith.select %13, %11, %15 : vector<160x128xi1>, vector<160x128xf32>
    %17 = arith.truncf %16 : vector<160x128xf32> to vector<160x128xbf16>
    %c0_14 = arith.constant 0 : index
    %c0_15 = arith.constant 0 : index
    %18 = vector.load %arg8[%c0_14, %c0_15] : memref<168x384xbf16, #tpu.memory_space<vmem>>, vector<160x128xbf16>
    tpu.vector_store %arg8[%c0_14, %c0_15], %17 {strides = array<i32>} : memref<168x384xbf16, #tpu.memory_space<vmem>>, vector<160x128xbf16>,
    %19 = vector.extract_strided_slice %10 {offsets = [17, 128], sizes = [128, 128], strides = [1, 1]} : vector<160x256xf32> to vector<128x128xf32>
    %c0_16 = arith.constant 0 : index
    %c0_17 = arith.constant 0 : index
    %20 = vector.load %arg9[%c0_16, %c0_17] : memref<128x128xf32, #tpu.memory_space<vmem>>, vector<128x128xf32>
    tpu.vector_store %arg9[%c0_16, %c0_17], %19 {strides = array<i32>} : memref<128x128xf32, #tpu.memory_space<vmem>>, vector<128x128xf32>,
    %c0_i32 = arith.constant 0 : i32
    %21 = arith.cmpi eq, %arg1, %c0_i32 : i32
    %22 = arith.extui %21 : i1 to i32
    %c0_i32_18 = arith.constant 0 : i32
    %23 = arith.cmpi ne, %22, %c0_i32_18 : i32
    scf.if %23 {
      %cst_55 = arith.constant 0.000000e+00 : bf16
      %64 = vector.broadcast %cst_55 : bf16 to vector<16x128xbf16>
      %c0_56 = arith.constant 0 : index
      %c0_57 = arith.constant 0 : index
      %65 = vector.load %arg8[%c0_56, %c0_57] : memref<168x384xbf16, #tpu.memory_space<vmem>>, vector<16x128xbf16>
      tpu.vector_store %arg8[%c0_56, %c0_57], %64 {strides = array<i32>} : memref<168x384xbf16, #tpu.memory_space<vmem>>, vector<16x128xbf16>,
    } else {
    }
    %c0_i32_19 = arith.constant 0 : i32
    %24 = arith.cmpi eq, %arg1, %c0_i32_19 : i32
    %25 = arith.extui %24 : i1 to i32
    %c0_i32_20 = arith.constant 0 : i32
    %26 = arith.cmpi ne, %25, %c0_i32_20 : i32
    scf.if %26 {
      %cst_55 = arith.constant 0.000000e+00 : bf16
      %64 = vector.broadcast %cst_55 : bf16 to vector<16x128xbf16>
      %c144 = arith.constant 144 : index
      %c0_56 = arith.constant 0 : index
      %65 = vector.load %arg8[%c144, %c0_56] : memref<168x384xbf16, #tpu.memory_space<vmem>>, vector<16x128xbf16>
      tpu.vector_store %arg8[%c144, %c0_56], %64 {strides = array<i32>} : memref<168x384xbf16, #tpu.memory_space<vmem>>, vector<16x128xbf16>,
    } else {
    }
    %cst_21 = arith.constant 0.000000e+00 : bf16
    %27 = vector.broadcast %cst_21 : bf16 to vector<8x128xbf16>
    %c160 = arith.constant 160 : index
    %c0_22 = arith.constant 0 : index
    %28 = vector.load %arg8[%c160, %c0_22] : memref<168x384xbf16, #tpu.memory_space<vmem>>, vector<8x128xbf16>
    tpu.vector_store %arg8[%c160, %c0_22], %27 {strides = array<i32>} : memref<168x384xbf16, #tpu.memory_space<vmem>>, vector<8x128xbf16>,
    %c1_23 = arith.constant 1 : index
    %c0_24 = arith.constant 0 : index
    %29 = vector.load %arg8[%c1_23, %c0_24] : memref<168x384xbf16, #tpu.memory_space<vmem>>, vector<160x128xbf16>
    %c0_25 = arith.constant 0 : index
    %c128 = arith.constant 128 : index
    %30 = vector.load %arg8[%c0_25, %c128] : memref<168x384xbf16, #tpu.memory_space<vmem>>, vector<160x128xbf16>
    tpu.vector_store %arg8[%c0_25, %c128], %29 {strides = array<i32>} : memref<168x384xbf16, #tpu.memory_space<vmem>>, vector<160x128xbf16>,
    %c2 = arith.constant 2 : index
    %c0_26 = arith.constant 0 : index
    %31 = vector.load %arg8[%c2, %c0_26] : memref<168x384xbf16, #tpu.memory_space<vmem>>, vector<160x128xbf16>
    %c0_27 = arith.constant 0 : index
    %c256 = arith.constant 256 : index
    %32 = vector.load %arg8[%c0_27, %c256] : memref<168x384xbf16, #tpu.memory_space<vmem>>, vector<160x128xbf16>
    tpu.vector_store %arg8[%c0_27, %c256], %31 {strides = array<i32>} : memref<168x384xbf16, #tpu.memory_space<vmem>>, vector<160x128xbf16>,
    %c0_28 = arith.constant 0 : index
    %c0_29 = arith.constant 0 : index
    %33 = vector.load %arg8[%c0_28, %c0_29] : memref<168x384xbf16, #tpu.memory_space<vmem>>, vector<128x384xbf16>
    %c0_30 = arith.constant 0 : index
    %c0_31 = arith.constant 0 : index
    %c0_32 = arith.constant 0 : index
    %34 = vector.load %arg4[%c0_30, %c0_31, %c0_32] : memref<3x384x128xbf16, #tpu.memory_space<vmem>>, vector<1x384x128xbf16>
    %35 = vector.shape_cast %34 : vector<1x384x128xbf16> to vector<384x128xbf16>
    %cst_33 = arith.constant dense<0.000000e+00> : vector<128x128xf32>
    %36 = tpu.matmul %33, %35, %cst_33 {dimension_numbers = #tpu.dot_dimension_numbers<[1], [0], [0], [1], [0, 0, 1, 1], [], []>} : vector<128x384xbf16>, vector<384x128xbf16>, vector<128x128xf32> -> vector<128x128xf32>
    %c16_34 = arith.constant 16 : index
    %c0_35 = arith.constant 0 : index
    %37 = vector.load %arg8[%c16_34, %c0_35] : memref<168x384xbf16, #tpu.memory_space<vmem>>, vector<128x384xbf16>
    %c1_36 = arith.constant 1 : index
    %c0_37 = arith.constant 0 : index
    %c0_38 = arith.constant 0 : index
    %38 = vector.load %arg4[%c1_36, %c0_37, %c0_38] : memref<3x384x128xbf16, #tpu.memory_space<vmem>>, vector<1x384x128xbf16>
    %39 = vector.shape_cast %38 : vector<1x384x128xbf16> to vector<384x128xbf16>
    %cst_39 = arith.constant dense<0.000000e+00> : vector<128x128xf32>
    %40 = tpu.matmul %37, %39, %cst_39 {dimension_numbers = #tpu.dot_dimension_numbers<[1], [0], [0], [1], [0, 0, 1, 1], [], []>} : vector<128x384xbf16>, vector<384x128xbf16>, vector<128x128xf32> -> vector<128x128xf32>
    %41 = arith.addf %36, %40 : vector<128x128xf32>
    %c32 = arith.constant 32 : index
    %c0_40 = arith.constant 0 : index
    %42 = vector.load %arg8[%c32, %c0_40] : memref<168x384xbf16, #tpu.memory_space<vmem>>, vector<128x384xbf16>
    %c2_41 = arith.constant 2 : index
    %c0_42 = arith.constant 0 : index
    %c0_43 = arith.constant 0 : index
    %43 = vector.load %arg4[%c2_41, %c0_42, %c0_43] : memref<3x384x128xbf16, #tpu.memory_space<vmem>>, vector<1x384x128xbf16>
    %44 = vector.shape_cast %43 : vector<1x384x128xbf16> to vector<384x128xbf16>
    %cst_44 = arith.constant dense<0.000000e+00> : vector<128x128xf32>
    %45 = tpu.matmul %42, %44, %cst_44 {dimension_numbers = #tpu.dot_dimension_numbers<[1], [0], [0], [1], [0, 0, 1, 1], [], []>} : vector<128x384xbf16>, vector<384x128xbf16>, vector<128x128xf32> -> vector<128x128xf32>
    %46 = arith.addf %41, %45 : vector<128x128xf32>
    %cst_45 = arith.constant 0.000000e+00 : f32
    %47 = vector.broadcast %cst_45 : f32 to vector<128x128xf32>
    %48 = arith.cmpf oge, %46, %47 : vector<128x128xf32>
    %cst_46 = arith.constant 2.000000e-01 : f32
    %49 = vector.broadcast %cst_46 : f32 to vector<128x128xf32>
    %50 = arith.mulf %49, %46 : vector<128x128xf32>
    %51 = arith.select %48, %46, %50 : vector<128x128xi1>, vector<128x128xf32>
    %c0_47 = arith.constant 0 : index
    %c0_48 = arith.constant 0 : index
    %52 = vector.load %arg9[%c0_47, %c0_48] : memref<128x128xf32, #tpu.memory_space<vmem>>, vector<128x128xf32>
    %c0_49 = arith.constant 0 : index
    %c0_50 = arith.constant 0 : index
    %53 = vector.load %arg5[%c0_49, %c0_50] : memref<1x128xf32, #tpu.memory_space<vmem>>, vector<1x128xf32>
    %54 = vector.broadcast %53 : vector<1x128xf32> to vector<128x128xf32>
    %55 = arith.addf %52, %54 : vector<128x128xf32>
    %c0_51 = arith.constant 0 : index
    %56 = memref.load %arg6[%c0_51] : memref<1xf32, #tpu.memory_space<smem>>
    %57 = vector.broadcast %56 : f32 to vector<128x128xf32>
    %58 = arith.mulf %57, %51 : vector<128x128xf32>
    %59 = arith.addf %55, %58 : vector<128x128xf32>
    %60 = arith.truncf %59 : vector<128x128xf32> to vector<128x128xbf16>
    %c0_52 = arith.constant 0 : index
    %c0_53 = arith.constant 0 : index
    %c0_54 = arith.constant 0 : index
    %61 = vector.load %arg7[%c0_52, %c0_53, %c0_54] : memref<1x128x128xbf16, #tpu.memory_space<vmem>>, vector<1x128x128xbf16>
    %62 = vector.shape_cast %61 : vector<1x128x128xbf16> to vector<128x128xbf16>
    %63 = vector.shape_cast %60 : vector<128x128xbf16> to vector<1x128x128xbf16>
    tpu.vector_store %arg7[%c0_52, %c0_53, %c0_54], %63 {strides = array<i32>} : memref<1x128x128xbf16, #tpu.memory_space<vmem>>, vector<1x128x128xbf16>,
    return
  }
  func.func @transform_0(%arg0: i32, %arg1: i32) -> (i32, i32, i32, i32) {
    %c0_i32 = arith.constant 0 : i32
    %c0_i32_0 = arith.constant 0 : i32
    %c0_i32_1 = arith.constant 0 : i32
    return %arg0, %arg1, %c0_i32, %c0_i32_0 : i32, i32, i32, i32
  }
  func.func @transform_1(%arg0: i32, %arg1: i32) -> (i32, i32, i32) {
    %c0_i32 = arith.constant 0 : i32
    %c0_i32_0 = arith.constant 0 : i32
    %c0_i32_1 = arith.constant 0 : i32
    %c0_i32_2 = arith.constant 0 : i32
    return %c0_i32, %c0_i32_0, %c0_i32_1 : i32, i32, i32
  }
  func.func @transform_2(%arg0: i32, %arg1: i32) -> (i32, i32, i32) {
    %c0_i32 = arith.constant 0 : i32
    %c0_i32_0 = arith.constant 0 : i32
    %c0_i32_1 = arith.constant 0 : i32
    %c0_i32_2 = arith.constant 0 : i32
    return %c0_i32, %c0_i32_0, %c0_i32_1 : i32, i32, i32
  }
  func.func @transform_3(%arg0: i32, %arg1: i32) -> (i32, i32) {
    %c0_i32 = arith.constant 0 : i32
    %c0_i32_0 = arith.constant 0 : i32
    %c0_i32_1 = arith.constant 0 : i32
    return %c0_i32, %c0_i32_0 : i32, i32
  }
  func.func @transform_4(%arg0: i32, %arg1: i32) -> i32 {
    %c0_i32 = arith.constant 0 : i32
    %c0_i32_0 = arith.constant 0 : i32
    return %c0_i32 : i32
  }
  func.func @transform_5(%arg0: i32, %arg1: i32) -> (i32, i32, i32) {
    %c0_i32 = arith.constant 0 : i32
    %c0_i32_0 = arith.constant 0 : i32
    return %arg0, %arg1, %c0_i32 : i32, i32, i32
  }
}

</mosaic_0001>

<llo_original>
// kernel: resD_forward.1
$region0: #{resD_forward.1}
  #allocation0 [shape = 'u32[]', space=smem, size = 0x4, offset = 0x4, fixed_abs, tag = 'smem constant byte address 0x4 - core index']
  #allocation1 [shape = 'u32[144,128]{1,0:T(1,128)}', space=vmem, size = 0x12000, scoped, tag = 'internal scratch']
  #allocation2 [shape = 'bf16[168,384]{1,0:T(8,128)(2,1)}', space=vmem, size = 0x1f800, scoped, tag = 'scratch operand']
  #allocation3 [shape = 'f32[128,128]{1,0:T(8,128)}', space=vmem, size = 0x10000, scoped, tag = 'scratch operand']
  #allocation4 [shape = 'f32[1]{0:T(128)S(6)}', space=smem, size = 0x200, scoped, tag = 'scoped memory for resD_forward.1']
  %s0 = inlined_call_operand.vmem [shape: bf16[2,1,176,128], index: 0, kind: input, shape index: {}]
  %s1 = inlined_call_operand.vmem [shape: bf16[2,128,256], index: 1, kind: input, shape index: {}]
  %s2 = inlined_call_operand.vmem [shape: bf16[3,384,128], index: 2, kind: input, shape index: {}]
  %s3 = inlined_call_operand.vmem [shape: f32[1,128], index: 3, kind: input, shape index: {}]
  %s4 = inlined_call_operand.<no memory space> [shape: f32[1], index: 4, kind: input, shape index: {}]
  %s5 = inlined_call_operand.vmem [shape: bf16[2,128,128], index: 5, kind: output, shape index: {}]
  %s6 = sld [smem:[#allocation0]]
  $region57: #{resD_forward.1} parent=0
    _
  %s8 = ssub.s32 1, %s6
  %s9 = scalar_select 0, %s8, %s6
  %10 = sst [smem:[#allocation4]] %s4
  loop: start=0, step=1, limit=4
  $region2: #{resD_forward.1} parent=0 // loop_pre_header
    _
  $region3: #{resD_forward.1} parent=0 // loop_header
    %s12 = sphi 0, %s16
    %p13 = scmp.ge.s32.totalorder %s12, 4
    %s19 = sphi 0, %s31
    %s20 = sphi 0, %s27
    %s21 = sphi 0, %s19
    %s22 = sphi 0, %s20
    %s23 = sphi 0, %s21
    %s24 = sphi 0, %s22
    %s36 = sphi 0, %s38
    %s39 = sphi 0, %s36
    %s40 = sphi 0, %s39
    %s56 = sphi 0, %s40
    %s60 = sphi 0, %s60
    %s62 = sphi 0, %s60
    %s63 = sphi 0, %s62
    %s77 = sphi 0, %s63
    %s81 = sphi 0, %s81
    %s83 = sphi 0, %s81
    %s84 = sphi 0, %s83
    %s98 = sphi 0, %s84
    %s102 = sphi 0, %s102
    %s104 = sphi 0, %s102
    %s105 = sphi 0, %s104
    %s119 = sphi 0, %s105
    %s123 = sphi 0, %s123
    %s125 = sphi 0, %s123
    %s126 = sphi 0, %s125
    %s140 = sphi 0, %s126
    %s148 = sphi 0, %s150
    %s151 = sphi 0, %s148
    %s152 = sphi 0, %s151
    %s168 = sphi 0, %s152
  $region4: #{resD_forward.1} parent=0 // loop_header_branch
    %15 = sbr.rel (%p13) target = $region8
  $region5: #{resD_forward.1} parent=0 // loop_body
    %s17 = ssub.s32 %s12, 1
    %s18 = ssub.s32 %s12, 2
    %s25 = sadd.s32 1, %s20
    %p26 = scmp.ge.s32.totalorder %s25, 1
    %s27 = scalar_select %p26, 0, %s25
    %s28 = sadd.s32 1, %s19
    %s29 = scalar_select %p26, %s28, %s19
    %p30 = scmp.ge.s32.totalorder %s29, 2
    %s31 = scalar_select %p30, 0, %s29
    %s32 = ssub.s32 %s19, %s31
    %s33 = ssub.s32 %s20, %s27
    %s34 = sor.u32 %s32, %s33
    %p35 = scmp.eq.s32.totalorder %s34, 0
    %s37 = sadd.s32 %s36, 1
    %s38 = scalar_select %p35, %s36, %s37
    %p41 = pneg %p35
    %p42 = scmp.eq.s32.totalorder %s12, 1
    %p43 = por %p41, %p42
    %p44 = scmp.ne.s32.totalorder %s36, %s39
    %p45 = scmp.eq.s32.totalorder %s12, 0
    %p46 = por %p44, %p45
    %p47 = scmp.ne.s32.totalorder %s36, %s39
    %p48 = scmp.eq.s32.totalorder %s17, 1
    %p49 = por %p47, %p48
    %p50 = scmp.ne.s32.totalorder %s39, %s40
    %p51 = scmp.eq.s32.totalorder %s17, 0
    %p52 = por %p50, %p51
    %p53 = scmp.ne.s32.totalorder %s39, %s40
    %p54 = scmp.eq.s32.totalorder %s18, 1
    %p55 = por %p53, %p54
    %p57 = scmp.ne.s32.totalorder %s40, %s56
    %p58 = scmp.eq.s32.totalorder %s18, 0
    %p59 = por %p57, %p58
    %s61 = sadd.s32 %s60, 1
    %p64 = scmp.eq.s32.totalorder %s12, 1
    %p65 = scmp.ne.s32.totalorder %s60, %s62
    %p66 = scmp.eq.s32.totalorder %s12, 0
    %p67 = por %p65, %p66
    %p68 = scmp.ne.s32.totalorder %s60, %s62
    %p69 = scmp.eq.s32.totalorder %s17, 1
    %p70 = por %p68, %p69
    %p71 = scmp.ne.s32.totalorder %s62, %s63
    %p72 = scmp.eq.s32.totalorder %s17, 0
    %p73 = por %p71, %p72
    %p74 = scmp.ne.s32.totalorder %s62, %s63
    %p75 = scmp.eq.s32.totalorder %s18, 1
    %p76 = por %p74, %p75
    %p78 = scmp.ne.s32.totalorder %s63, %s77
    %p79 = scmp.eq.s32.totalorder %s18, 0
    %p80 = por %p78, %p79
    %s82 = sadd.s32 %s81, 1
    %p85 = scmp.eq.s32.totalorder %s12, 1
    %p86 = scmp.ne.s32.totalorder %s81, %s83
    %p87 = scmp.eq.s32.totalorder %s12, 0
    %p88 = por %p86, %p87
    %p89 = scmp.ne.s32.totalorder %s81, %s83
    %p90 = scmp.eq.s32.totalorder %s17, 1
    %p91 = por %p89, %p90
    %p92 = scmp.ne.s32.totalorder %s83, %s84
    %p93 = scmp.eq.s32.totalorder %s17, 0
    %p94 = por %p92, %p93
    %p95 = scmp.ne.s32.totalorder %s83, %s84
    %p96 = scmp.eq.s32.totalorder %s18, 1
    %p97 = por %p95, %p96
    %p99 = scmp.ne.s32.totalorder %s84, %s98
    %p100 = scmp.eq.s32.totalorder %s18, 0
    %p101 = por %p99, %p100
    %s103 = sadd.s32 %s102, 1
    %p106 = scmp.eq.s32.totalorder %s12, 1
    %p107 = scmp.ne.s32.totalorder %s102, %s104
    %p108 = scmp.eq.s32.totalorder %s12, 0
    %p109 = por %p107, %p108
    %p110 = scmp.ne.s32.totalorder %s102, %s104
    %p111 = scmp.eq.s32.totalorder %s17, 1
    %p112 = por %p110, %p111
    %p113 = scmp.ne.s32.totalorder %s104, %s105
    %p114 = scmp.eq.s32.totalorder %s17, 0
    %p115 = por %p113, %p114
    %p116 = scmp.ne.s32.totalorder %s104, %s105
    %p117 = scmp.eq.s32.totalorder %s18, 1
    %p118 = por %p116, %p117
    %p120 = scmp.ne.s32.totalorder %s105, %s119
    %p121 = scmp.eq.s32.totalorder %s18, 0
    %p122 = por %p120, %p121
    %s124 = sadd.s32 %s123, 1
    %p127 = scmp.eq.s32.totalorder %s12, 1
    %p128 = scmp.ne.s32.totalorder %s123, %s125
    %p129 = scmp.eq.s32.totalorder %s12, 0
    %p130 = por %p128, %p129
    %p131 = scmp.ne.s32.totalorder %s123, %s125
    %p132 = scmp.eq.s32.totalorder %s17, 1
    %p133 = por %p131, %p132
    %p134 = scmp.ne.s32.totalorder %s125, %s126
    %p135 = scmp.eq.s32.totalorder %s17, 0
    %p136 = por %p134, %p135
    %p137 = scmp.ne.s32.totalorder %s125, %s126
    %p138 = scmp.eq.s32.totalorder %s18, 1
    %p139 = por %p137, %p138
    %p141 = scmp.ne.s32.totalorder %s126, %s140
    %p142 = scmp.eq.s32.totalorder %s18, 0
    %p143 = por %p141, %p142
    %s144 = ssub.s32 %s19, %s31
    %s145 = ssub.s32 %s20, %s27
    %s146 = sor.u32 %s144, %s145
    %p147 = scmp.eq.s32.totalorder %s146, 0
    %s149 = sadd.s32 %s148, 1
    %s150 = scalar_select %p147, %s148, %s149
    %p153 = pneg %p147
    %p154 = scmp.eq.s32.totalorder %s12, 1
    %p155 = por %p153, %p154
    %p156 = scmp.ne.s32.totalorder %s148, %s151
    %p157 = scmp.eq.s32.totalorder %s12, 0
    %p158 = por %p156, %p157
    %p159 = scmp.ne.s32.totalorder %s148, %s151
    %p160 = scmp.eq.s32.totalorder %s17, 1
    %p161 = por %p159, %p160
    %p162 = scmp.ne.s32.totalorder %s151, %s152
    %p163 = scmp.eq.s32.totalorder %s17, 0
    %p164 = por %p162, %p163
    %p165 = scmp.ne.s32.totalorder %s151, %s152
    %p166 = scmp.eq.s32.totalorder %s18, 1
    %p167 = por %p165, %p166
    %p169 = scmp.ne.s32.totalorder %s152, %s168
    %p170 = scmp.eq.s32.totalorder %s18, 0
    %p171 = por %p169, %p170
    %p172 = scmp.le.s32.totalorder 1, %s12
    %p173 = scmp.lt.s32.totalorder %s12, 3
    %p174 = pnand %p172, %p173
    %p175 = pneg %p174
    // Predicated region
    $region9: #{resD_forward.1} parent=5 // pred_check
      _
    $region10: #{resD_forward.1} parent=5 // pred_check_branch
      %177 = sbr.rel (%p174) target = $region12
    $region11: #{resD_forward.1} parent=5 // pred_region
      %s178 = ssub.s32 %s12, 1
      // Predicated region
      $region13: #{resD_forward.1} parent=11 // pred_check
        %p179 = pneg %p73
      $region14: #{resD_forward.1} parent=11 // pred_check_branch
        %181 = sbr.rel (%p179) target = $region16
      $region15: #{resD_forward.1} parent=11 // pred_region
        _
      $region16: #{resD_forward.1} parent=11 // pred_fallthru
        _
      // Predicated region
      $region17: #{resD_forward.1} parent=11 // pred_check
        %p182 = pneg %p94
      $region18: #{resD_forward.1} parent=11 // pred_check_branch
        %184 = sbr.rel (%p182) target = $region20
      $region19: #{resD_forward.1} parent=11 // pred_region
        _
      $region20: #{resD_forward.1} parent=11 // pred_fallthru
        _
      // Predicated region
      $region21: #{resD_forward.1} parent=11 // pred_check
        %p185 = pneg %p115
      $region22: #{resD_forward.1} parent=11 // pred_check_branch
        %187 = sbr.rel (%p185) target = $region24
      $region23: #{resD_forward.1} parent=11 // pred_region
        _
      $region24: #{resD_forward.1} parent=11 // pred_fallthru
        _
      // Predicated region
      $region25: #{resD_forward.1} parent=11 // pred_check
        %p188 = pneg %p136
      $region26: #{resD_forward.1} parent=11 // pred_check_branch
        %190 = sbr.rel (%p188) target = $region28
      $region27: #{resD_forward.1} parent=11 // pred_region
        _
      $region28: #{resD_forward.1} parent=11 // pred_fallthru
        _
    $region12: #{resD_forward.1} parent=5 // pred_fallthru
      _
    %p191 = scmp.lt.s32.totalorder %s12, 2
    // Predicated region
    $region29: #{resD_forward.1} parent=5 // pred_check
      %p192 = pneg %p191
    $region30: #{resD_forward.1} parent=5 // pred_check_branch
      %194 = sbr.rel (%p192) target = $region32
    $region31: #{resD_forward.1} parent=5 // pred_region
      // Predicated region
      $region33: #{resD_forward.1} parent=31 // pred_check
        %p195 = pneg %p46
      $region34: #{resD_forward.1} parent=31 // pred_check_branch
        %197 = sbr.rel (%p195) target = $region36
      $region35: #{resD_forward.1} parent=31 // pred_region
        %p198 = scmp.lt.s32.totalorder %s19, 1
        %s199 = scalar_select %p198, %s19, 1
        %p200 = scmp.lt.s32.totalorder %s20, 0
        %s201 = scalar_select %p200, %s20, 0
        %s202 = smul.addr %s201, 22
        %s203 = smul.addr %s199, 22
        %s204 = sadd.s32 %s202, %s203
        %s205 = smul.addr %s204, 4
        %s206 = scalar_lea.vmem %s0, %s205
      $region36: #{resD_forward.1} parent=31 // pred_fallthru
        _
    $region32: #{resD_forward.1} parent=5 // pred_fallthru
      _
    %p207 = scmp.le.s32.totalorder 1, %s12
    %p208 = scmp.lt.s32.totalorder %s12, 3
    %p209 = pnand %p207, %p208
    %p210 = pneg %p209
    // Predicated region
    $region37: #{resD_forward.1} parent=5 // pred_check
      _
    $region38: #{resD_forward.1} parent=5 // pred_check_branch
      %212 = sbr.rel (%p209) target = $region40
    $region39: #{resD_forward.1} parent=5 // pred_region
      %s213 = ssub.s32 %s12, 1
      %p214 = scmp.lt.s32.totalorder %s21, 1
      %s215 = scalar_select %p214, %s21, 1
      %p216 = scmp.lt.s32.totalorder %s22, 0
      %s217 = scalar_select %p216, %s22, 0
      %s218 = smul.addr %s217, 22
      %s219 = smul.addr %s215, 22
      %s220 = sadd.s32 %s218, %s219
      %s221 = smul.addr %s220, 4
      %s222 = scalar_lea.vmem %s0, %s221
      %p223 = pneg %p52
      %p224 = pneg %p49
      %p225 = pneg %p73
      %p226 = pneg %p70
      %p227 = pneg %p94
      %p228 = pneg %p91
      %p229 = pneg %p115
      %p230 = pneg %p112
      %p231 = pneg %p136
      %p232 = pneg %p133
      %p233 = pneg %p164
      %p234 = pneg %p161
      %s235 = smul.u32 16, %s22
      %p236 = scmp.lt.s32.totalorder %s21, 1
      %s237 = scalar_select %p236, %s21, 1
      %p238 = scmp.lt.s32.totalorder %s235, 15
      %s239 = scalar_select %p238, %s235, 15
      %s240 = smul.addr %s237, 16
      %s241 = sadd.s32 %s239, %s240
      %s242 = smul.addr %s241, 4
      %s243 = scalar_lea.vmem %s5, %s242
      %p244 = scmp.lt.s32.totalorder %s21, 1
      %s245 = scalar_select %p244, %s21, 1
      %p246 = scmp.lt.s32.totalorder %s22, 0
      %s247 = scalar_select %p246, %s22, 0
      %s248 = smul.addr %s247, 22
      %s249 = smul.addr %s245, 22
      %s250 = sadd.s32 %s248, %s249
      %s251 = smul.addr %s250, 4
      %s252 = scalar_lea.vmem %s0, %s251
      %s253 = smul.u32 16, %s22
      %p254 = scmp.lt.s32.totalorder %s21, 1
      %s255 = scalar_select %p254, %s21, 1
      %p256 = scmp.lt.s32.totalorder %s253, 15
      %s257 = scalar_select %p256, %s253, 15
      %s258 = smul.addr %s255, 16
      %s259 = sadd.s32 %s257, %s258
      %s260 = smul.addr %s259, 4
      %s261 = scalar_lea.vmem %s5, %s260
      %s262 = smul.u32 16, %s22
      %v264 = vld [vmem:[%s252] sm:$0xf]
      %v265 = vld [vmem:[%s252 + $0x4] sm:$0xf]
      %v266 = vld [vmem:[%s252 + $0x8] sm:$0xf]
      %v267 = vld [vmem:[%s252 + $0xc] sm:$0xf]
      %v268 = vld [vmem:[%s252 + $0x10] sm:$0xf]
      %v269 = vld [vmem:[%s252 + $0x14] sm:$0xf]
      %v270 = vld [vmem:[%s252 + $0x18] sm:$0xf]
      %v271 = vld [vmem:[%s252 + $0x1c] sm:$0xf]
      %v272 = vld [vmem:[%s252 + $0x20] sm:$0xf]
      %v273 = vld [vmem:[%s252 + $0x24] sm:$0xf]
      %v274 = vld [vmem:[%s252 + $0x28] sm:$0xf]
      %v275 = vld [vmem:[%s252 + $0x2c] sm:$0xf]
      %v276 = vld [vmem:[%s252 + $0x30] sm:$0xf]
      %v277 = vld [vmem:[%s252 + $0x34] sm:$0xf]
      %v278 = vld [vmem:[%s252 + $0x38] sm:$0xf]
      %v279 = vld [vmem:[%s252 + $0x3c] sm:$0xf]
      %v280 = vld [vmem:[%s252 + $0x40] sm:$0xf]
      %v281 = vld [vmem:[%s252 + $0x44] sm:$0xf]
      %v282 = vld [vmem:[%s252 + $0x48] sm:$0xf]
      %v283 = vld [vmem:[%s252 + $0x4c] sm:$0xf]
      %v284 = vld [vmem:[%s1] sm:$0xff]
      %v285 = vld [vmem:[%s1 + $0x8] sm:$0xff]
      %v286 = vld [vmem:[%s1 + $0x10] sm:$0xff]
      %v287 = vld [vmem:[%s1 + $0x18] sm:$0xff]
      %v288 = vld [vmem:[%s1 + $0x20] sm:$0xff]
      %v289 = vld [vmem:[%s1 + $0x28] sm:$0xff]
      %v290 = vld [vmem:[%s1 + $0x30] sm:$0xff]
      %v291 = vld [vmem:[%s1 + $0x38] sm:$0xff]
      %v292 = vld [vmem:[%s1 + $0x40] sm:$0xff]
      %v293 = vld [vmem:[%s1 + $0x48] sm:$0xff]
      %v294 = vld [vmem:[%s1 + $0x50] sm:$0xff]
      %v295 = vld [vmem:[%s1 + $0x58] sm:$0xff]
      %v296 = vld [vmem:[%s1 + $0x60] sm:$0xff]
      %v297 = vld [vmem:[%s1 + $0x68] sm:$0xff]
      %v298 = vld [vmem:[%s1 + $0x70] sm:$0xff]
      %v299 = vld [vmem:[%s1 + $0x78] sm:$0xff]
      %v300 = vld [vmem:[%s252 + $0x8] sm:$0xf]
      %v301 = vld [vmem:[%s252 + $0xc] sm:$0xf]
      %v302 = vld [vmem:[%s252 + $0x10] sm:$0xf]
      %v303 = vld [vmem:[%s252 + $0x14] sm:$0xf]
      %v304 = vld [vmem:[%s252 + $0x18] sm:$0xf]
      %v305 = vld [vmem:[%s252 + $0x1c] sm:$0xf]
      %v306 = vld [vmem:[%s252 + $0x20] sm:$0xf]
      %v307 = vld [vmem:[%s252 + $0x24] sm:$0xf]
      %v308 = vld [vmem:[%s252 + $0x28] sm:$0xf]
      %v309 = vld [vmem:[%s252 + $0x2c] sm:$0xf]
      %v310 = vld [vmem:[%s252 + $0x30] sm:$0xf]
      %v311 = vld [vmem:[%s252 + $0x34] sm:$0xf]
      %v312 = vld [vmem:[%s252 + $0x38] sm:$0xf]
      %v313 = vld [vmem:[%s252 + $0x3c] sm:$0xf]
      %v314 = vld [vmem:[%s252 + $0x40] sm:$0xf]
      %v315 = vld [vmem:[%s252 + $0x44] sm:$0xf]
      %v316 = vld [vmem:[%s252 + $0x48] sm:$0xf]
      %v317 = vld [vmem:[%s252 + $0x4c] sm:$0xf]
      %v318 = vld [vmem:[%s252 + $0x50] sm:$0xf]
      %v319 = vld [vmem:[%s252 + $0x54] sm:$0xf]
      %s320 = scalar_lea.vmem %s1, 128
      %v321 = vld [vmem:[%s320] sm:$0xff]
      %v322 = vld [vmem:[%s320 + $0x8] sm:$0xff]
      %v323 = vld [vmem:[%s320 + $0x10] sm:$0xff]
      %v324 = vld [vmem:[%s320 + $0x18] sm:$0xff]
      %v325 = vld [vmem:[%s320 + $0x20] sm:$0xff]
      %v326 = vld [vmem:[%s320 + $0x28] sm:$0xff]
      %v327 = vld [vmem:[%s320 + $0x30] sm:$0xff]
      %v328 = vld [vmem:[%s320 + $0x38] sm:$0xff]
      %v329 = vld [vmem:[%s320 + $0x40] sm:$0xff]
      %v330 = vld [vmem:[%s320 + $0x48] sm:$0xff]
      %v331 = vld [vmem:[%s320 + $0x50] sm:$0xff]
      %v332 = vld [vmem:[%s320 + $0x58] sm:$0xff]
      %v333 = vld [vmem:[%s320 + $0x60] sm:$0xff]
      %v334 = vld [vmem:[%s320 + $0x68] sm:$0xff]
      %v335 = vld [vmem:[%s320 + $0x70] sm:$0xff]
      %v336 = vld [vmem:[%s320 + $0x78] sm:$0xff]
      %v357 = vunpack.c.l.b16 %v300
      %v358 = vunpack.c.l.b16 %v301
      %v359 = vunpack.c.l.b16 %v302
      %v360 = vunpack.c.l.b16 %v303
      %v361 = vunpack.c.l.b16 %v304
      %v362 = vunpack.c.l.b16 %v305
      %v363 = vunpack.c.l.b16 %v306
      %v364 = vunpack.c.l.b16 %v307
      %v365 = vunpack.c.l.b16 %v308
      %v366 = vunpack.c.l.b16 %v309
      %v367 = vunpack.c.l.b16 %v310
      %v368 = vunpack.c.l.b16 %v311
      %v369 = vunpack.c.l.b16 %v312
      %v370 = vunpack.c.l.b16 %v313
      %v371 = vunpack.c.l.b16 %v314
      %v372 = vunpack.c.l.b16 %v315
      %v373 = vunpack.c.l.b16 %v316
      %v374 = vunpack.c.l.b16 %v317
      %v375 = vunpack.c.l.b16 %v318
      %v376 = vunpack.c.l.b16 %v319
      %v377 = vpack.c.b16 %v358, %v357
      %v378 = vpack.c.b16 %v360, %v359
      %v379 = vpack.c.b16 %v362, %v361
      %v380 = vpack.c.b16 %v364, %v363
      %v381 = vpack.c.b16 %v366, %v365
      %v382 = vpack.c.b16 %v368, %v367
      %v383 = vpack.c.b16 %v370, %v369
      %v384 = vpack.c.b16 %v372, %v371
      %v385 = vpack.c.b16 %v374, %v373
      %v386 = vpack.c.b16 %v376, %v375
      %v413 = vunpack.c.l.b16 %v321
      %v414 = vunpack.c.h.b16 %v321
      %v415 = vunpack.c.l.b16 %v322
      %v416 = vunpack.c.h.b16 %v322
      %v417 = vunpack.c.l.b16 %v323
      %v418 = vunpack.c.h.b16 %v323
      %v419 = vunpack.c.l.b16 %v324
      %v420 = vunpack.c.h.b16 %v324
      %v421 = vunpack.c.l.b16 %v325
      %v422 = vunpack.c.h.b16 %v325
      %v423 = vunpack.c.l.b16 %v326
      %v424 = vunpack.c.h.b16 %v326
      %v425 = vunpack.c.l.b16 %v327
      %v426 = vunpack.c.h.b16 %v327
      %v427 = vunpack.c.l.b16 %v328
      %v428 = vunpack.c.h.b16 %v328
      %v429 = vunpack.c.l.b16 %v329
      %v430 = vunpack.c.h.b16 %v329
      %v431 = vunpack.c.l.b16 %v330
      %v432 = vunpack.c.h.b16 %v330
      %v433 = vunpack.c.l.b16 %v331
      %v434 = vunpack.c.h.b16 %v331
      %v435 = vunpack.c.l.b16 %v332
      %v436 = vunpack.c.h.b16 %v332
      %v437 = vunpack.c.l.b16 %v333
      %v438 = vunpack.c.h.b16 %v333
      %v439 = vunpack.c.l.b16 %v334
      %v440 = vunpack.c.h.b16 %v334
      %v441 = vunpack.c.l.b16 %v335
      %v442 = vunpack.c.h.b16 %v335
      %v443 = vunpack.c.l.b16 %v336
      %v444 = vunpack.c.h.b16 %v336
      %v445 = vpack.c.b16 %v415, %v413
      %v446 = vpack.c.b16 %v416, %v414
      %v447 = vpack.c.b16 %v419, %v417
      %v448 = vpack.c.b16 %v420, %v418
      %v449 = vpack.c.b16 %v423, %v421
      %v450 = vpack.c.b16 %v424, %v422
      %v451 = vpack.c.b16 %v427, %v425
      %v452 = vpack.c.b16 %v428, %v426
      %v453 = vpack.c.b16 %v431, %v429
      %v454 = vpack.c.b16 %v432, %v430
      %v455 = vpack.c.b16 %v435, %v433
      %v456 = vpack.c.b16 %v436, %v434
      %v457 = vpack.c.b16 %v439, %v437
      %v458 = vpack.c.b16 %v440, %v438
      %v459 = vpack.c.b16 %v443, %v441
      %v460 = vpack.c.b16 %v444, %v442
      %477 = vmatprep.subr.bf16.mxu0 %v460
      %478 = vmatpush1.bf16.msra.mxu0 %v459
      %479 = vmatprep.subr.bf16.mxu0 %v458
      %480 = vmatpush1.bf16.msra.mxu0 %v457
      %481 = vmatprep.subr.bf16.mxu0 %v456
      %482 = vmatpush1.bf16.msra.mxu0 %v455
      %483 = vmatprep.subr.bf16.mxu0 %v454
      %484 = vmatpush1.bf16.msra.mxu0 %v453
      %485 = vmatprep.subr.bf16.mxu0 %v452
      %486 = vmatpush1.bf16.msra.mxu0 %v451
      %487 = vmatprep.subr.bf16.mxu0 %v450
      %488 = vmatpush1.bf16.msra.mxu0 %v449
      %489 = vmatprep.subr.bf16.mxu0 %v448
      %490 = vmatpush1.bf16.msra.mxu0 %v447
      %491 = vmatprep.subr.bf16.mxu0 %v446
      %492 = vmatpush1.bf16.msra.mxu0 %v445
      %493 = vmatprep.subr.bf16.mxu0 0
      %494 = vmatpush2.bf16.msra.mxu0 0
      %495 = vmatprep.subr.bf16.mxu0 0
      %496 = vmatpush2.bf16.msra.mxu0 0
      %497 = vmatprep.subr.bf16.mxu0 0
      %498 = vmatpush2.bf16.msra.mxu0 0
      %499 = vmatprep.subr.bf16.mxu0 0
      %500 = vmatpush2.bf16.msra.mxu0 0
      %501 = vmatprep.subr.bf16.mxu0 0
      %502 = vmatpush2.bf16.msra.mxu0 0
      %503 = vmatprep.subr.bf16.mxu0 0
      %504 = vmatpush2.bf16.msra.mxu0 0
      %505 = vmatprep.subr.bf16.mxu0 0
      %506 = vmatpush2.bf16.msra.mxu0 0
      %507 = vmatprep.subr.bf16.mxu0 0
      %508 = vmatpush2.bf16.msra.mxu0 0
      %509 = vmatprep.mubr.bf16.mxu0 0
      %510 = vmatmul.mubr.bf16.gmra.mxu0 %v377
      %v511 = vpop.f32.mrf.mxu0
      %v512 = vadd.f32 0.0, %v511
      %v513 = vpop.f32.mrf.mxu0
      %v514 = vpop.f32.mrf.mxu0
      %v515 = vadd.f32 0.0, %v514
      %v516 = vpop.f32.mrf.mxu0
      %517 = vmatprep.mubr.bf16.mxu0 0
      %518 = vmatmul.mubr.bf16.gmra.mxu0 %v378
      %v519 = vpop.f32.mrf.mxu0
      %v520 = vadd.f32 0.0, %v519
      %v521 = vpop.f32.mrf.mxu0
      %v522 = vadd.f32 0.0, %v521
      %v523 = vpop.f32.mrf.mxu0
      %v524 = vadd.f32 0.0, %v523
      %v525 = vpop.f32.mrf.mxu0
      %v526 = vadd.f32 0.0, %v525
      %527 = vmatprep.mubr.bf16.mxu0 0
      %528 = vmatmul.mubr.bf16.gmra.mxu0 %v379
      %v529 = vpop.f32.mrf.mxu0
      %v530 = vadd.f32 0.0, %v529
      %v531 = vpop.f32.mrf.mxu0
      %v532 = vadd.f32 0.0, %v531
      %v533 = vpop.f32.mrf.mxu0
      %v534 = vadd.f32 0.0, %v533
      %v535 = vpop.f32.mrf.mxu0
      %v536 = vadd.f32 0.0, %v535
      %537 = vmatprep.mubr.bf16.mxu0 0
      %538 = vmatmul.mubr.bf16.gmra.mxu0 %v380
      %v539 = vpop.f32.mrf.mxu0
      %v540 = vadd.f32 0.0, %v539
      %v541 = vpop.f32.mrf.mxu0
      %v542 = vadd.f32 0.0, %v541
      %v543 = vpop.f32.mrf.mxu0
      %v544 = vadd.f32 0.0, %v543
      %v545 = vpop.f32.mrf.mxu0
      %v546 = vadd.f32 0.0, %v545
      %547 = vmatprep.mubr.bf16.mxu0 0
      %548 = vmatmul.mubr.bf16.gmra.mxu0 %v381
      %v549 = vpop.f32.mrf.mxu0
      %v550 = vadd.f32 0.0, %v549
      %v551 = vpop.f32.mrf.mxu0
      %v552 = vadd.f32 0.0, %v551
      %v553 = vpop.f32.mrf.mxu0
      %v554 = vadd.f32 0.0, %v553
      %v555 = vpop.f32.mrf.mxu0
      %v556 = vadd.f32 0.0, %v555
      %557 = vmatprep.mubr.bf16.mxu0 0
      %558 = vmatmul.mubr.bf16.gmra.mxu0 %v382
      %v559 = vpop.f32.mrf.mxu0
      %v560 = vadd.f32 0.0, %v559
      %v561 = vpop.f32.mrf.mxu0
      %v562 = vadd.f32 0.0, %v561
      %v563 = vpop.f32.mrf.mxu0
      %v564 = vadd.f32 0.0, %v563
      %v565 = vpop.f32.mrf.mxu0
      %v566 = vadd.f32 0.0, %v565
      %567 = vmatprep.mubr.bf16.mxu0 0
      %568 = vmatmul.mubr.bf16.gmra.mxu0 %v383
      %v569 = vpop.f32.mrf.mxu0
      %v570 = vadd.f32 0.0, %v569
      %v571 = vpop.f32.mrf.mxu0
      %v572 = vadd.f32 0.0, %v571
      %v573 = vpop.f32.mrf.mxu0
      %v574 = vadd.f32 0.0, %v573
      %v575 = vpop.f32.mrf.mxu0
      %v576 = vadd.f32 0.0, %v575
      %577 = vmatprep.mubr.bf16.mxu0 0
      %578 = vmatmul.mubr.bf16.gmra.mxu0 %v384
      %v579 = vpop.f32.mrf.mxu0
      %v580 = vadd.f32 0.0, %v579
      %v581 = vpop.f32.mrf.mxu0
      %v582 = vadd.f32 0.0, %v581
      %v583 = vpop.f32.mrf.mxu0
      %v584 = vadd.f32 0.0, %v583
      %v585 = vpop.f32.mrf.mxu0
      %v586 = vadd.f32 0.0, %v585
      %587 = vmatprep.mubr.bf16.mxu0 0
      %588 = vmatmul.mubr.bf16.gmra.mxu0 %v385
      %v589 = vpop.f32.mrf.mxu0
      %v590 = vadd.f32 0.0, %v589
      %v591 = vpop.f32.mrf.mxu0
      %v592 = vadd.f32 0.0, %v591
      %v593 = vpop.f32.mrf.mxu0
      %v594 = vadd.f32 0.0, %v593
      %v595 = vpop.f32.mrf.mxu0
      %v596 = vadd.f32 0.0, %v595
      %597 = vmatprep.mubr.bf16.mxu0 0
      %598 = vmatmul.mubr.bf16.gmra.mxu0 %v386
      %v599 = vpop.f32.mrf.mxu0
      %v600 = vadd.f32 0.0, %v599
      %v601 = vpop.f32.mrf.mxu0
      %v602 = vadd.f32 0.0, %v601
      %v603 = vpop.f32.mrf.mxu0
      %v604 = vadd.f32 0.0, %v603
      %v605 = vpop.f32.mrf.mxu0
      %606 = vdwg.mxu0
      %v627 = vunpack.c.l.b16 %v264
      %v628 = vunpack.c.l.b16 %v265
      %v629 = vunpack.c.l.b16 %v266
      %v630 = vunpack.c.l.b16 %v267
      %v631 = vunpack.c.l.b16 %v268
      %v632 = vunpack.c.l.b16 %v269
      %v633 = vunpack.c.l.b16 %v270
      %v634 = vunpack.c.l.b16 %v271
      %v635 = vunpack.c.l.b16 %v272
      %v636 = vunpack.c.l.b16 %v273
      %v637 = vunpack.c.l.b16 %v274
      %v638 = vunpack.c.l.b16 %v275
      %v639 = vunpack.c.l.b16 %v276
      %v640 = vunpack.c.l.b16 %v277
      %v641 = vunpack.c.l.b16 %v278
      %v642 = vunpack.c.l.b16 %v279
      %v643 = vunpack.c.l.b16 %v280
      %v644 = vunpack.c.l.b16 %v281
      %v645 = vunpack.c.l.b16 %v282
      %v646 = vunpack.c.l.b16 %v283
      %v647 = vpack.c.b16 %v628, %v627
      %v648 = vpack.c.b16 %v630, %v629
      %v649 = vpack.c.b16 %v632, %v631
      %v650 = vpack.c.b16 %v634, %v633
      %v651 = vpack.c.b16 %v636, %v635
      %v652 = vpack.c.b16 %v638, %v637
      %v653 = vpack.c.b16 %v640, %v639
      %v654 = vpack.c.b16 %v642, %v641
      %v655 = vpack.c.b16 %v644, %v643
      %v656 = vpack.c.b16 %v646, %v645
      %v683 = vunpack.c.l.b16 %v284
      %v684 = vunpack.c.h.b16 %v284
      %v685 = vunpack.c.l.b16 %v285
      %v686 = vunpack.c.h.b16 %v285
      %v687 = vunpack.c.l.b16 %v286
      %v688 = vunpack.c.h.b16 %v286
      %v689 = vunpack.c.l.b16 %v287
      %v690 = vunpack.c.h.b16 %v287
      %v691 = vunpack.c.l.b16 %v288
      %v692 = vunpack.c.h.b16 %v288
      %v693 = vunpack.c.l.b16 %v289
      %v694 = vunpack.c.h.b16 %v289
      %v695 = vunpack.c.l.b16 %v290
      %v696 = vunpack.c.h.b16 %v290
      %v697 = vunpack.c.l.b16 %v291
      %v698 = vunpack.c.h.b16 %v291
      %v699 = vunpack.c.l.b16 %v292
      %v700 = vunpack.c.h.b16 %v292
      %v701 = vunpack.c.l.b16 %v293
      %v702 = vunpack.c.h.b16 %v293
      %v703 = vunpack.c.l.b16 %v294
      %v704 = vunpack.c.h.b16 %v294
      %v705 = vunpack.c.l.b16 %v295
      %v706 = vunpack.c.h.b16 %v295
      %v707 = vunpack.c.l.b16 %v296
      %v708 = vunpack.c.h.b16 %v296
      %v709 = vunpack.c.l.b16 %v297
      %v710 = vunpack.c.h.b16 %v297
      %v711 = vunpack.c.l.b16 %v298
      %v712 = vunpack.c.h.b16 %v298
      %v713 = vunpack.c.l.b16 %v299
      %v714 = vunpack.c.h.b16 %v299
      %v715 = vpack.c.b16 %v685, %v683
      %v716 = vpack.c.b16 %v686, %v684
      %v717 = vpack.c.b16 %v689, %v687
      %v718 = vpack.c.b16 %v690, %v688
      %v719 = vpack.c.b16 %v693, %v691
      %v720 = vpack.c.b16 %v694, %v692
      %v721 = vpack.c.b16 %v697, %v695
      %v722 = vpack.c.b16 %v698, %v696
      %v723 = vpack.c.b16 %v701, %v699
      %v724 = vpack.c.b16 %v702, %v700
      %v725 = vpack.c.b16 %v705, %v703
      %v726 = vpack.c.b16 %v706, %v704
      %v727 = vpack.c.b16 %v709, %v707
      %v728 = vpack.c.b16 %v710, %v708
      %v729 = vpack.c.b16 %v713, %v711
      %v730 = vpack.c.b16 %v714, %v712
      %747 = vmatprep.subr.bf16.mxu0 %v730
      %748 = vmatpush1.bf16.msra.mxu0 %v729
      %749 = vmatprep.subr.bf16.mxu0 %v728
      %750 = vmatpush1.bf16.msra.mxu0 %v727
      %751 = vmatprep.subr.bf16.mxu0 %v726
      %752 = vmatpush1.bf16.msra.mxu0 %v725
      %753 = vmatprep.subr.bf16.mxu0 %v724
      %754 = vmatpush1.bf16.msra.mxu0 %v723
      %755 = vmatprep.subr.bf16.mxu0 %v722
      %756 = vmatpush1.bf16.msra.mxu0 %v721
      %757 = vmatprep.subr.bf16.mxu0 %v720
      %758 = vmatpush1.bf16.msra.mxu0 %v719
      %759 = vmatprep.subr.bf16.mxu0 %v718
      %760 = vmatpush1.bf16.msra.mxu0 %v717
      %761 = vmatprep.subr.bf16.mxu0 %v716
      %762 = vmatpush1.bf16.msra.mxu0 %v715
      %763 = vmatprep.subr.bf16.mxu0 0
      %764 = vmatpush2.bf16.msra.mxu0 0
      %765 = vmatprep.subr.bf16.mxu0 0
      %766 = vmatpush2.bf16.msra.mxu0 0
      %767 = vmatprep.subr.bf16.mxu0 0
      %768 = vmatpush2.bf16.msra.mxu0 0
      %769 = vmatprep.subr.bf16.mxu0 0
      %770 = vmatpush2.bf16.msra.mxu0 0
      %771 = vmatprep.subr.bf16.mxu0 0
      %772 = vmatpush2.bf16.msra.mxu0 0
      %773 = vmatprep.subr.bf16.mxu0 0
      %774 = vmatpush2.bf16.msra.mxu0 0
      %775 = vmatprep.subr.bf16.mxu0 0
      %776 = vmatpush2.bf16.msra.mxu0 0
      %777 = vmatprep.subr.bf16.mxu0 0
      %778 = vmatpush2.bf16.msra.mxu0 0
      %779 = vmatprep.mubr.bf16.mxu0 0
      %780 = vmatmul.mubr.bf16.gmra.mxu0 %v647
      %v781 = vpop.f32.mrf.mxu0
      %v782 = vadd.f32 %v512, %v781
      %v783 = vpop.f32.mrf.mxu0
      %v784 = vpop.f32.mrf.mxu0
      %v785 = vadd.f32 %v515, %v784
      %v786 = vpop.f32.mrf.mxu0
      %787 = vmatprep.mubr.bf16.mxu0 0
      %788 = vmatmul.mubr.bf16.gmra.mxu0 %v648
      %v789 = vpop.f32.mrf.mxu0
      %v790 = vadd.f32 %v520, %v789
      %v791 = vpop.f32.mrf.mxu0
      %v792 = vadd.f32 %v522, %v791
      %v793 = vpop.f32.mrf.mxu0
      %v794 = vadd.f32 %v524, %v793
      %v795 = vpop.f32.mrf.mxu0
      %v796 = vadd.f32 %v526, %v795
      %797 = vmatprep.mubr.bf16.mxu0 0
      %798 = vmatmul.mubr.bf16.gmra.mxu0 %v649
      %v799 = vpop.f32.mrf.mxu0
      %v800 = vadd.f32 %v530, %v799
      %v801 = vpop.f32.mrf.mxu0
      %v802 = vadd.f32 %v532, %v801
      %v803 = vpop.f32.mrf.mxu0
      %v804 = vadd.f32 %v534, %v803
      %v805 = vpop.f32.mrf.mxu0
      %v806 = vadd.f32 %v536, %v805
      %807 = vmatprep.mubr.bf16.mxu0 0
      %808 = vmatmul.mubr.bf16.gmra.mxu0 %v650
      %v809 = vpop.f32.mrf.mxu0
      %v810 = vadd.f32 %v540, %v809
      %v811 = vpop.f32.mrf.mxu0
      %v812 = vadd.f32 %v542, %v811
      %v813 = vpop.f32.mrf.mxu0
      %v814 = vadd.f32 %v544, %v813
      %v815 = vpop.f32.mrf.mxu0
      %v816 = vadd.f32 %v546, %v815
      %817 = vmatprep.mubr.bf16.mxu0 0
      %818 = vmatmul.mubr.bf16.gmra.mxu0 %v651
      %v819 = vpop.f32.mrf.mxu0
      %v820 = vadd.f32 %v550, %v819
      %v821 = vpop.f32.mrf.mxu0
      %v822 = vadd.f32 %v552, %v821
      %v823 = vpop.f32.mrf.mxu0
      %v824 = vadd.f32 %v554, %v823
      %v825 = vpop.f32.mrf.mxu0
      %v826 = vadd.f32 %v556, %v825
      %827 = vmatprep.mubr.bf16.mxu0 0
      %828 = vmatmul.mubr.bf16.gmra.mxu0 %v652
      %v829 = vpop.f32.mrf.mxu0
      %v830 = vadd.f32 %v560, %v829
      %v831 = vpop.f32.mrf.mxu0
      %v832 = vadd.f32 %v562, %v831
      %v833 = vpop.f32.mrf.mxu0
      %v834 = vadd.f32 %v564, %v833
      %v835 = vpop.f32.mrf.mxu0
      %v836 = vadd.f32 %v566, %v835
      %837 = vmatprep.mubr.bf16.mxu0 0
      %838 = vmatmul.mubr.bf16.gmra.mxu0 %v653
      %v839 = vpop.f32.mrf.mxu0
      %v840 = vadd.f32 %v570, %v839
      %v841 = vpop.f32.mrf.mxu0
      %v842 = vadd.f32 %v572, %v841
      %v843 = vpop.f32.mrf.mxu0
      %v844 = vadd.f32 %v574, %v843
      %v845 = vpop.f32.mrf.mxu0
      %v846 = vadd.f32 %v576, %v845
      %847 = vmatprep.mubr.bf16.mxu0 0
      %848 = vmatmul.mubr.bf16.gmra.mxu0 %v654
      %v849 = vpop.f32.mrf.mxu0
      %v850 = vadd.f32 %v580, %v849
      %v851 = vpop.f32.mrf.mxu0
      %v852 = vadd.f32 %v582, %v851
      %v853 = vpop.f32.mrf.mxu0
      %v854 = vadd.f32 %v584, %v853
      %v855 = vpop.f32.mrf.mxu0
      %v856 = vadd.f32 %v586, %v855
      %857 = vmatprep.mubr.bf16.mxu0 0
      %858 = vmatmul.mubr.bf16.gmra.mxu0 %v655
      %v859 = vpop.f32.mrf.mxu0
      %v860 = vadd.f32 %v590, %v859
      %v861 = vpop.f32.mrf.mxu0
      %v862 = vadd.f32 %v592, %v861
      %v863 = vpop.f32.mrf.mxu0
      %v864 = vadd.f32 %v594, %v863
      %v865 = vpop.f32.mrf.mxu0
      %v866 = vadd.f32 %v596, %v865
      %867 = vmatprep.mubr.bf16.mxu0 0
      %868 = vmatmul.mubr.bf16.gmra.mxu0 %v656
      %v869 = vpop.f32.mrf.mxu0
      %v870 = vadd.f32 %v600, %v869
      %v871 = vpop.f32.mrf.mxu0
      %v872 = vadd.f32 %v602, %v871
      %v873 = vpop.f32.mrf.mxu0
      %v874 = vadd.f32 %v604, %v873
      %v875 = vpop.f32.mrf.mxu0
      %876 = vdwg.mxu0
      %vm877 = vcmp.ge.f32.partialorder %v782, 0.0
      %vm878 = vcmp.ge.f32.partialorder %v785, 0.0
      %vm879 = vcmp.ge.f32.partialorder %v790, 0.0
      %vm880 = vcmp.ge.f32.partialorder %v794, 0.0
      %vm881 = vcmp.ge.f32.partialorder %v800, 0.0
      %vm882 = vcmp.ge.f32.partialorder %v804, 0.0
      %vm883 = vcmp.ge.f32.partialorder %v810, 0.0
      %vm884 = vcmp.ge.f32.partialorder %v814, 0.0
      %vm885 = vcmp.ge.f32.partialorder %v820, 0.0
      %vm886 = vcmp.ge.f32.partialorder %v824, 0.0
      %vm887 = vcmp.ge.f32.partialorder %v830, 0.0
      %vm888 = vcmp.ge.f32.partialorder %v834, 0.0
      %vm889 = vcmp.ge.f32.partialorder %v840, 0.0
      %vm890 = vcmp.ge.f32.partialorder %v844, 0.0
      %vm891 = vcmp.ge.f32.partialorder %v850, 0.0
      %vm892 = vcmp.ge.f32.partialorder %v854, 0.0
      %vm893 = vcmp.ge.f32.partialorder %v860, 0.0
      %vm894 = vcmp.ge.f32.partialorder %v864, 0.0
      %vm895 = vcmp.ge.f32.partialorder %v870, 0.0
      %vm896 = vcmp.ge.f32.partialorder %v874, 0.0
      %v897 = vmul.f32 %v782, 0.2
      %v898 = vmul.f32 %v785, 0.2
      %v899 = vmul.f32 %v790, 0.2
      %v900 = vmul.f32 %v794, 0.2
      %v901 = vmul.f32 %v800, 0.2
      %v902 = vmul.f32 %v804, 0.2
      %v903 = vmul.f32 %v810, 0.2
      %v904 = vmul.f32 %v814, 0.2
      %v905 = vmul.f32 %v820, 0.2
      %v906 = vmul.f32 %v824, 0.2
      %v907 = vmul.f32 %v830, 0.2
      %v908 = vmul.f32 %v834, 0.2
      %v909 = vmul.f32 %v840, 0.2
      %v910 = vmul.f32 %v844, 0.2
      %v911 = vmul.f32 %v850, 0.2
      %v912 = vmul.f32 %v854, 0.2
      %v913 = vmul.f32 %v860, 0.2
      %v914 = vmul.f32 %v864, 0.2
      %v915 = vmul.f32 %v870, 0.2
      %v916 = vmul.f32 %v874, 0.2
      %v917 = vsel %vm877, %v782, %v897
      %v918 = vsel %vm878, %v785, %v898
      %v919 = vsel %vm879, %v790, %v899
      %v920 = vsel %vm880, %v794, %v900
      %v921 = vsel %vm881, %v800, %v901
      %v922 = vsel %vm882, %v804, %v902
      %v923 = vsel %vm883, %v810, %v903
      %v924 = vsel %vm884, %v814, %v904
      %v925 = vsel %vm885, %v820, %v905
      %v926 = vsel %vm886, %v824, %v906
      %v927 = vsel %vm887, %v830, %v907
      %v928 = vsel %vm888, %v834, %v908
      %v929 = vsel %vm889, %v840, %v909
      %v930 = vsel %vm890, %v844, %v910
      %v931 = vsel %vm891, %v850, %v911
      %v932 = vsel %vm892, %v854, %v912
      %v933 = vsel %vm893, %v860, %v913
      %v934 = vsel %vm894, %v864, %v914
      %v935 = vsel %vm895, %v870, %v915
      %v936 = vsel %vm896, %v874, %v916
      %v937 = vpack.c.bf16 %v918, %v917
      %v938 = vpack.c.bf16 %v920, %v919
      %v939 = vpack.c.bf16 %v922, %v921
      %v940 = vpack.c.bf16 %v924, %v923
      %v941 = vpack.c.bf16 %v926, %v925
      %v942 = vpack.c.bf16 %v928, %v927
      %v943 = vpack.c.bf16 %v930, %v929
      %v944 = vpack.c.bf16 %v932, %v931
      %v945 = vpack.c.bf16 %v934, %v933
      %v946 = vpack.c.bf16 %v936, %v935
      %v957 = vunpack.c.l.b16 %v937
      %v958 = vunpack.c.h.b16 %v937
      %v959 = vunpack.c.l.b16 %v938
      %v960 = vunpack.c.h.b16 %v938
      %v961 = vunpack.c.l.b16 %v939
      %v962 = vunpack.c.h.b16 %v939
      %v963 = vunpack.c.l.b16 %v940
      %v964 = vunpack.c.h.b16 %v940
      %v965 = vunpack.c.l.b16 %v941
      %v966 = vunpack.c.h.b16 %v941
      %v967 = vunpack.c.l.b16 %v942
      %v968 = vunpack.c.h.b16 %v942
      %v969 = vunpack.c.l.b16 %v943
      %v970 = vunpack.c.h.b16 %v943
      %v971 = vunpack.c.l.b16 %v944
      %v972 = vunpack.c.h.b16 %v944
      %v973 = vunpack.c.l.b16 %v945
      %v974 = vunpack.c.h.b16 %v945
      %v975 = vunpack.c.l.b16 %v946
      %v976 = vunpack.c.h.b16 %v946
      %v977 = vpack.c.b16 %v957, %v957
      %v978 = vpack.c.b16 %v958, %v958
      %v979 = vpack.c.b16 %v959, %v959
      %v980 = vpack.c.b16 %v960, %v960
      %v981 = vpack.c.b16 %v961, %v961
      %v982 = vpack.c.b16 %v962, %v962
      %v983 = vpack.c.b16 %v963, %v963
      %v984 = vpack.c.b16 %v964, %v964
      %v985 = vpack.c.b16 %v965, %v965
      %v986 = vpack.c.b16 %v966, %v966
      %v987 = vpack.c.b16 %v967, %v967
      %v988 = vpack.c.b16 %v968, %v968
      %v989 = vpack.c.b16 %v969, %v969
      %v990 = vpack.c.b16 %v970, %v970
      %v991 = vpack.c.b16 %v971, %v971
      %v992 = vpack.c.b16 %v972, %v972
      %v993 = vpack.c.b16 %v973, %v973
      %v994 = vpack.c.b16 %v974, %v974
      %v995 = vpack.c.b16 %v975, %v975
      %v996 = vpack.c.b16 %v976, %v976
      %1017 = vst [vmem:[#allocation2] sm:$0xf] %v977
      %1018 = vst [vmem:[#allocation2 + $0xc] sm:$0xf] %v978
      %1019 = vst [vmem:[#allocation2 + $0x18] sm:$0xf] %v979
      %1020 = vst [vmem:[#allocation2 + $0x24] sm:$0xf] %v980
      %1021 = vst [vmem:[#allocation2 + $0x30] sm:$0xf] %v981
      %1022 = vst [vmem:[#allocation2 + $0x3c] sm:$0xf] %v982
      %1023 = vst [vmem:[#allocation2 + $0x48] sm:$0xf] %v983
      %1024 = vst [vmem:[#allocation2 + $0x54] sm:$0xf] %v984
      %1025 = vst [vmem:[#allocation2 + $0x60] sm:$0xf] %v985
      %1026 = vst [vmem:[#allocation2 + $0x6c] sm:$0xf] %v986
      %1027 = vst [vmem:[#allocation2 + $0x78] sm:$0xf] %v987
      %1028 = vst [vmem:[#allocation2 + $0x84] sm:$0xf] %v988
      %1029 = vst [vmem:[#allocation2 + $0x90] sm:$0xf] %v989
      %1030 = vst [vmem:[#allocation2 + $0x9c] sm:$0xf] %v990
      %1031 = vst [vmem:[#allocation2 + $0xa8] sm:$0xf] %v991
      %1032 = vst [vmem:[#allocation2 + $0xb4] sm:$0xf] %v992
      %1033 = vst [vmem:[#allocation2 + $0xc0] sm:$0xf] %v993
      %1034 = vst [vmem:[#allocation2 + $0xcc] sm:$0xf] %v994
      %1035 = vst [vmem:[#allocation2 + $0xd8] sm:$0xf] %v995
      %1036 = vst [vmem:[#allocation2 + $0xe4] sm:$0xf] %v996
      %1037 = vst [vmem:[#allocation3 - $0x1] sm:$0xfe] %v792
      %1038 = vst [vmem:[#allocation3 + $0x7] sm:$0xff] %v796
      %1039 = vst [vmem:[#allocation3 + $0xf] sm:$0xff] %v802
      %1040 = vst [vmem:[#allocation3 + $0x17] sm:$0xff] %v806
      %1041 = vst [vmem:[#allocation3 + $0x1f] sm:$0xff] %v812
      %1042 = vst [vmem:[#allocation3 + $0x27] sm:$0xff] %v816
      %1043 = vst [vmem:[#allocation3 + $0x2f] sm:$0xff] %v822
      %1044 = vst [vmem:[#allocation3 + $0x37] sm:$0xff] %v826
      %1045 = vst [vmem:[#allocation3 + $0x3f] sm:$0xff] %v832
      %1046 = vst [vmem:[#allocation3 + $0x47] sm:$0xff] %v836
      %1047 = vst [vmem:[#allocation3 + $0x4f] sm:$0xff] %v842
      %1048 = vst [vmem:[#allocation3 + $0x57] sm:$0xff] %v846
      %1049 = vst [vmem:[#allocation3 + $0x5f] sm:$0xff] %v852
      %1050 = vst [vmem:[#allocation3 + $0x67] sm:$0xff] %v856
      %1051 = vst [vmem:[#allocation3 + $0x6f] sm:$0xff] %v862
      %1052 = vst [vmem:[#allocation3 + $0x77] sm:$0xff] %v866
      %1053 = vst [vmem:[#allocation3 + $0x7f] sm:$0x1] %v872
      %p1054 = scmp.eq.s32.totalorder %s22, 0
      // Predicated region
      $region41: #{resD_forward.1} parent=39 // pred_check
        %p1055 = pneg %p1054
      $region42: #{resD_forward.1} parent=39 // pred_check_branch
        %1057 = sbr.rel (%p1055) target = $region44
      $region43: #{resD_forward.1} parent=39 // pred_region
        %1058 = vst [vmem:[#allocation2] sm:$0xf] 0
        %1059 = vst [vmem:[#allocation2 + $0xc] sm:$0xf] 0
        %1060 = vst [vmem:[#allocation2 + $0xd8] sm:$0xf] 0
        %1061 = vst [vmem:[#allocation2 + $0xe4] sm:$0xf] 0
      $region44: #{resD_forward.1} parent=39 // pred_fallthru
        _
      %1062 = vst [vmem:[#allocation2 + $0xf0] sm:$0xf] 0
      %v1063 = vld [vmem:[#allocation2] sm:$0xf]
      %v1064 = vld [vmem:[#allocation2 + $0xc] sm:$0xf]
      %v1065 = vld [vmem:[#allocation2 + $0x18] sm:$0xf]
      %v1066 = vld [vmem:[#allocation2 + $0x24] sm:$0xf]
      %v1067 = vld [vmem:[#allocation2 + $0x30] sm:$0xf]
      %v1068 = vld [vmem:[#allocation2 + $0x3c] sm:$0xf]
      %v1069 = vld [vmem:[#allocation2 + $0x48] sm:$0xf]
      %v1070 = vld [vmem:[#allocation2 + $0x54] sm:$0xf]
      %v1071 = vld [vmem:[#allocation2 + $0x60] sm:$0xf]
      %v1072 = vld [vmem:[#allocation2 + $0x6c] sm:$0xf]
      %v1073 = vld [vmem:[#allocation2 + $0x78] sm:$0xf]
      %v1074 = vld [vmem:[#allocation2 + $0x84] sm:$0xf]
      %v1075 = vld [vmem:[#allocation2 + $0x90] sm:$0xf]
      %v1076 = vld [vmem:[#allocation2 + $0x9c] sm:$0xf]
      %v1077 = vld [vmem:[#allocation2 + $0xa8] sm:$0xf]
      %v1078 = vld [vmem:[#allocation2 + $0xb4] sm:$0xf]
      %v1079 = vld [vmem:[#allocation2 + $0xc0] sm:$0xf]
      %v1080 = vld [vmem:[#allocation2 + $0xcc] sm:$0xf]
      %v1081 = vld [vmem:[#allocation2 + $0xd8] sm:$0xf]
      %v1082 = vld [vmem:[#allocation2 + $0xe4] sm:$0xf]
      %v1083 = vld [vmem:[#allocation2 + $0xf0] sm:$0x1]
      %vm1084 = vsmask.f32 3328
      %vm1085 = vsmask.f32 7440
      %vm1086 = vmor %vm1084, %vm1085
      %v1088 = vshrl.u32 %v1063, 16
      %v1090 = vrot.slane %v1088, 4
      %v1091 = vshll.u32 %v1063, 16
      %v1093 = vrot.slane %v1091, 5
      %v1094 = vor.u32 %v1090, %v1093
      %v1095 = vrot.slane %v1094, 4
      %v1097 = vshll.u32 %v1064, 16
      %v1099 = vrot.slane %v1097, 5
      %v1100 = vsel %vm1086, %v1095, %v1099
      %v1101 = vshrl.u32 %v1064, 16
      %v1103 = vrot.slane %v1101, 4
      %v1104 = vor.u32 %v1103, %v1099
      %v1105 = vrot.slane %v1104, 4
      %v1107 = vshll.u32 %v1065, 16
      %v1109 = vrot.slane %v1107, 5
      %v1110 = vsel %vm1086, %v1105, %v1109
      %v1111 = vshrl.u32 %v1065, 16
      %v1113 = vrot.slane %v1111, 4
      %v1114 = vor.u32 %v1113, %v1109
      %v1115 = vrot.slane %v1114, 4
      %v1117 = vshll.u32 %v1066, 16
      %v1119 = vrot.slane %v1117, 5
      %v1120 = vsel %vm1086, %v1115, %v1119
      %v1121 = vshrl.u32 %v1066, 16
      %v1123 = vrot.slane %v1121, 4
      %v1124 = vor.u32 %v1123, %v1119
      %v1125 = vrot.slane %v1124, 4
      %v1127 = vshll.u32 %v1067, 16
      %v1129 = vrot.slane %v1127, 5
      %v1130 = vsel %vm1086, %v1125, %v1129
      %v1131 = vshrl.u32 %v1067, 16
      %v1133 = vrot.slane %v1131, 4
      %v1134 = vor.u32 %v1133, %v1129
      %v1135 = vrot.slane %v1134, 4
      %v1137 = vshll.u32 %v1068, 16
      %v1139 = vrot.slane %v1137, 5
      %v1140 = vsel %vm1086, %v1135, %v1139
      %v1141 = vshrl.u32 %v1068, 16
      %v1143 = vrot.slane %v1141, 4
      %v1144 = vor.u32 %v1143, %v1139
      %v1145 = vrot.slane %v1144, 4
      %v1147 = vshll.u32 %v1069, 16
      %v1149 = vrot.slane %v1147, 5
      %v1150 = vsel %vm1086, %v1145, %v1149
      %v1151 = vshrl.u32 %v1069, 16
      %v1153 = vrot.slane %v1151, 4
      %v1154 = vor.u32 %v1153, %v1149
      %v1155 = vrot.slane %v1154, 4
      %v1157 = vshll.u32 %v1070, 16
      %v1159 = vrot.slane %v1157, 5
      %v1160 = vsel %vm1086, %v1155, %v1159
      %v1161 = vshrl.u32 %v1070, 16
      %v1163 = vrot.slane %v1161, 4
      %v1164 = vor.u32 %v1163, %v1159
      %v1165 = vrot.slane %v1164, 4
      %v1167 = vshll.u32 %v1071, 16
      %v1169 = vrot.slane %v1167, 5
      %v1170 = vsel %vm1086, %v1165, %v1169
      %v1171 = vshrl.u32 %v1071, 16
      %v1173 = vrot.slane %v1171, 4
      %v1174 = vor.u32 %v1173, %v1169
      %v1175 = vrot.slane %v1174, 4
      %v1177 = vshll.u32 %v1072, 16
      %v1179 = vrot.slane %v1177, 5
      %v1180 = vsel %vm1086, %v1175, %v1179
      %v1181 = vshrl.u32 %v1072, 16
      %v1183 = vrot.slane %v1181, 4
      %v1184 = vor.u32 %v1183, %v1179
      %v1185 = vrot.slane %v1184, 4
      %v1187 = vshll.u32 %v1073, 16
      %v1189 = vrot.slane %v1187, 5
      %v1190 = vsel %vm1086, %v1185, %v1189
      %v1191 = vshrl.u32 %v1073, 16
      %v1193 = vrot.slane %v1191, 4
      %v1194 = vor.u32 %v1193, %v1189
      %v1195 = vrot.slane %v1194, 4
      %v1197 = vshll.u32 %v1074, 16
      %v1199 = vrot.slane %v1197, 5
      %v1200 = vsel %vm1086, %v1195, %v1199
      %v1201 = vshrl.u32 %v1074, 16
      %v1203 = vrot.slane %v1201, 4
      %v1204 = vor.u32 %v1203, %v1199
      %v1205 = vrot.slane %v1204, 4
      %v1207 = vshll.u32 %v1075, 16
      %v1209 = vrot.slane %v1207, 5
      %v1210 = vsel %vm1086, %v1205, %v1209
      %v1211 = vshrl.u32 %v1075, 16
      %v1213 = vrot.slane %v1211, 4
      %v1214 = vor.u32 %v1213, %v1209
      %v1215 = vrot.slane %v1214, 4
      %v1217 = vshll.u32 %v1076, 16
      %v1219 = vrot.slane %v1217, 5
      %v1220 = vsel %vm1086, %v1215, %v1219
      %v1221 = vshrl.u32 %v1076, 16
      %v1223 = vrot.slane %v1221, 4
      %v1224 = vor.u32 %v1223, %v1219
      %v1225 = vrot.slane %v1224, 4
      %v1227 = vshll.u32 %v1077, 16
      %v1229 = vrot.slane %v1227, 5
      %v1230 = vsel %vm1086, %v1225, %v1229
      %v1231 = vshrl.u32 %v1077, 16
      %v1233 = vrot.slane %v1231, 4
      %v1234 = vor.u32 %v1233, %v1229
      %v1235 = vrot.slane %v1234, 4
      %v1237 = vshll.u32 %v1078, 16
      %v1239 = vrot.slane %v1237, 5
      %v1240 = vsel %vm1086, %v1235, %v1239
      %v1241 = vshrl.u32 %v1078, 16
      %v1243 = vrot.slane %v1241, 4
      %v1244 = vor.u32 %v1243, %v1239
      %v1245 = vrot.slane %v1244, 4
      %v1247 = vshll.u32 %v1079, 16
      %v1249 = vrot.slane %v1247, 5
      %v1250 = vsel %vm1086, %v1245, %v1249
      %v1251 = vshrl.u32 %v1079, 16
      %v1253 = vrot.slane %v1251, 4
      %v1254 = vor.u32 %v1253, %v1249
      %v1255 = vrot.slane %v1254, 4
      %v1257 = vshll.u32 %v1080, 16
      %v1259 = vrot.slane %v1257, 5
      %v1260 = vsel %vm1086, %v1255, %v1259
      %v1261 = vshrl.u32 %v1080, 16
      %v1263 = vrot.slane %v1261, 4
      %v1264 = vor.u32 %v1263, %v1259
      %v1265 = vrot.slane %v1264, 4
      %v1267 = vshll.u32 %v1081, 16
      %v1269 = vrot.slane %v1267, 5
      %v1270 = vsel %vm1086, %v1265, %v1269
      %v1271 = vshrl.u32 %v1081, 16
      %v1273 = vrot.slane %v1271, 4
      %v1274 = vor.u32 %v1273, %v1269
      %v1275 = vrot.slane %v1274, 4
      %v1277 = vshll.u32 %v1082, 16
      %v1279 = vrot.slane %v1277, 5
      %v1280 = vsel %vm1086, %v1275, %v1279
      %v1281 = vshrl.u32 %v1082, 16
      %v1283 = vrot.slane %v1281, 4
      %v1284 = vor.u32 %v1283, %v1279
      %v1285 = vrot.slane %v1284, 4
      %v1287 = vshll.u32 %v1083, 16
      %v1289 = vrot.slane %v1287, 5
      %v1290 = vsel %vm1086, %v1285, %v1289
      %1311 = vst [vmem:[#allocation2 + $0x4] sm:$0xf] %v1100
      %1312 = vst [vmem:[#allocation2 + $0x10] sm:$0xf] %v1110
      %1313 = vst [vmem:[#allocation2 + $0x1c] sm:$0xf] %v1120
      %1314 = vst [vmem:[#allocation2 + $0x28] sm:$0xf] %v1130
      %1315 = vst [vmem:[#allocation2 + $0x34] sm:$0xf] %v1140
      %1316 = vst [vmem:[#allocation2 + $0x40] sm:$0xf] %v1150
      %1317 = vst [vmem:[#allocation2 + $0x4c] sm:$0xf] %v1160
      %1318 = vst [vmem:[#allocation2 + $0x58] sm:$0xf] %v1170
      %1319 = vst [vmem:[#allocation2 + $0x64] sm:$0xf] %v1180
      %1320 = vst [vmem:[#allocation2 + $0x70] sm:$0xf] %v1190
      %1321 = vst [vmem:[#allocation2 + $0x7c] sm:$0xf] %v1200
      %1322 = vst [vmem:[#allocation2 + $0x88] sm:$0xf] %v1210
      %1323 = vst [vmem:[#allocation2 + $0x94] sm:$0xf] %v1220
      %1324 = vst [vmem:[#allocation2 + $0xa0] sm:$0xf] %v1230
      %1325 = vst [vmem:[#allocation2 + $0xac] sm:$0xf] %v1240
      %1326 = vst [vmem:[#allocation2 + $0xb8] sm:$0xf] %v1250
      %1327 = vst [vmem:[#allocation2 + $0xc4] sm:$0xf] %v1260
      %1328 = vst [vmem:[#allocation2 + $0xd0] sm:$0xf] %v1270
      %1329 = vst [vmem:[#allocation2 + $0xdc] sm:$0xf] %v1280
      %1330 = vst [vmem:[#allocation2 + $0xe8] sm:$0xf] %v1290
      %v1331 = vld [vmem:[#allocation2] sm:$0xe]
      %v1332 = vld [vmem:[#allocation2 + $0xc] sm:$0xf]
      %v1333 = vld [vmem:[#allocation2 + $0x18] sm:$0xf]
      %v1334 = vld [vmem:[#allocation2 + $0x24] sm:$0xf]
      %v1335 = vld [vmem:[#allocation2 + $0x30] sm:$0xf]
      %v1336 = vld [vmem:[#allocation2 + $0x3c] sm:$0xf]
      %v1337 = vld [vmem:[#allocation2 + $0x48] sm:$0xf]
      %v1338 = vld [vmem:[#allocation2 + $0x54] sm:$0xf]
      %v1339 = vld [vmem:[#allocation2 + $0x60] sm:$0xf]
      %v1340 = vld [vmem:[#allocation2 + $0x6c] sm:$0xf]
      %v1341 = vld [vmem:[#allocation2 + $0x78] sm:$0xf]
      %v1342 = vld [vmem:[#allocation2 + $0x84] sm:$0xf]
      %v1343 = vld [vmem:[#allocation2 + $0x90] sm:$0xf]
      %v1344 = vld [vmem:[#allocation2 + $0x9c] sm:$0xf]
      %v1345 = vld [vmem:[#allocation2 + $0xa8] sm:$0xf]
      %v1346 = vld [vmem:[#allocation2 + $0xb4] sm:$0xf]
      %v1347 = vld [vmem:[#allocation2 + $0xc0] sm:$0xf]
      %v1348 = vld [vmem:[#allocation2 + $0xcc] sm:$0xf]
      %v1349 = vld [vmem:[#allocation2 + $0xd8] sm:$0xf]
      %v1350 = vld [vmem:[#allocation2 + $0xe4] sm:$0xf]
      %v1351 = vld [vmem:[#allocation2 + $0xf0] sm:$0x1]
      %vm1373 = vcmask 1042432
      %vm1374 = vcmask 1046532
      %vm1375 = vmor %vm1373, %vm1374
      %v1376 = vrot.slane %v1331, 5
      %v1377 = vrot.slane %v1376, 4
      %v1378 = vrot.slane %v1332, 5
      %v1379 = vsel %vm1375, %v1377, %v1378
      %v1380 = vrot.slane %v1378, 4
      %v1381 = vrot.slane %v1333, 5
      %v1382 = vsel %vm1375, %v1380, %v1381
      %v1383 = vrot.slane %v1381, 4
      %v1384 = vrot.slane %v1334, 5
      %v1385 = vsel %vm1375, %v1383, %v1384
      %v1386 = vrot.slane %v1384, 4
      %v1387 = vrot.slane %v1335, 5
      %v1388 = vsel %vm1375, %v1386, %v1387
      %v1389 = vrot.slane %v1387, 4
      %v1390 = vrot.slane %v1336, 5
      %v1391 = vsel %vm1375, %v1389, %v1390
      %v1392 = vrot.slane %v1390, 4
      %v1393 = vrot.slane %v1337, 5
      %v1394 = vsel %vm1375, %v1392, %v1393
      %v1395 = vrot.slane %v1393, 4
      %v1396 = vrot.slane %v1338, 5
      %v1397 = vsel %vm1375, %v1395, %v1396
      %v1398 = vrot.slane %v1396, 4
      %v1399 = vrot.slane %v1339, 5
      %v1400 = vsel %vm1375, %v1398, %v1399
      %v1401 = vrot.slane %v1399, 4
      %v1402 = vrot.slane %v1340, 5
      %v1403 = vsel %vm1375, %v1401, %v1402
      %v1404 = vrot.slane %v1402, 4
      %v1405 = vrot.slane %v1341, 5
      %v1406 = vsel %vm1375, %v1404, %v1405
      %v1407 = vrot.slane %v1405, 4
      %v1408 = vrot.slane %v1342, 5
      %v1409 = vsel %vm1375, %v1407, %v1408
      %v1410 = vrot.slane %v1408, 4
      %v1411 = vrot.slane %v1343, 5
      %v1412 = vsel %vm1375, %v1410, %v1411
      %v1413 = vrot.slane %v1411, 4
      %v1414 = vrot.slane %v1344, 5
      %v1415 = vsel %vm1375, %v1413, %v1414
      %v1416 = vrot.slane %v1414, 4
      %v1417 = vrot.slane %v1345, 5
      %v1418 = vsel %vm1375, %v1416, %v1417
      %v1419 = vrot.slane %v1417, 4
      %v1420 = vrot.slane %v1346, 5
      %v1421 = vsel %vm1375, %v1419, %v1420
      %v1422 = vrot.slane %v1420, 4
      %v1423 = vrot.slane %v1347, 5
      %v1424 = vsel %vm1375, %v1422, %v1423
      %v1425 = vrot.slane %v1423, 4
      %v1426 = vrot.slane %v1348, 5
      %v1427 = vsel %vm1375, %v1425, %v1426
      %v1428 = vrot.slane %v1426, 4
      %v1429 = vrot.slane %v1349, 5
      %v1430 = vsel %vm1375, %v1428, %v1429
      %v1431 = vrot.slane %v1429, 4
      %v1432 = vrot.slane %v1350, 5
      %v1433 = vsel %vm1375, %v1431, %v1432
      %v1434 = vrot.slane %v1432, 4
      %v1435 = vrot.slane %v1351, 5
      %v1436 = vsel %vm1375, %v1434, %v1435
      %1457 = vst [vmem:[#allocation2 + $0x8] sm:$0xf] %v1379
      %1458 = vst [vmem:[#allocation2 + $0x14] sm:$0xf] %v1382
      %1459 = vst [vmem:[#allocation2 + $0x20] sm:$0xf] %v1385
      %1460 = vst [vmem:[#allocation2 + $0x2c] sm:$0xf] %v1388
      %1461 = vst [vmem:[#allocation2 + $0x38] sm:$0xf] %v1391
      %1462 = vst [vmem:[#allocation2 + $0x44] sm:$0xf] %v1394
      %1463 = vst [vmem:[#allocation2 + $0x50] sm:$0xf] %v1397
      %1464 = vst [vmem:[#allocation2 + $0x5c] sm:$0xf] %v1400
      %1465 = vst [vmem:[#allocation2 + $0x68] sm:$0xf] %v1403
      %1466 = vst [vmem:[#allocation2 + $0x74] sm:$0xf] %v1406
      %1467 = vst [vmem:[#allocation2 + $0x80] sm:$0xf] %v1409
      %1468 = vst [vmem:[#allocation2 + $0x8c] sm:$0xf] %v1412
      %1469 = vst [vmem:[#allocation2 + $0x98] sm:$0xf] %v1415
      %1470 = vst [vmem:[#allocation2 + $0xa4] sm:$0xf] %v1418
      %1471 = vst [vmem:[#allocation2 + $0xb0] sm:$0xf] %v1421
      %1472 = vst [vmem:[#allocation2 + $0xbc] sm:$0xf] %v1424
      %1473 = vst [vmem:[#allocation2 + $0xc8] sm:$0xf] %v1427
      %1474 = vst [vmem:[#allocation2 + $0xd4] sm:$0xf] %v1430
      %1475 = vst [vmem:[#allocation2 + $0xe0] sm:$0xf] %v1433
      %1476 = vst [vmem:[#allocation2 + $0xec] sm:$0xf] %v1436
      %v1477 = vld [vmem:[#allocation2] sm:$0xff]
      %v1478 = vld [vmem:[#allocation2 + $0x8] sm:$0xf]
      %v1479 = vld [vmem:[#allocation2 + $0xc] sm:$0xff]
      %v1480 = vld [vmem:[#allocation2 + $0x14] sm:$0xf]
      %v1481 = vld [vmem:[#allocation2 + $0x18] sm:$0xff]
      %v1482 = vld [vmem:[#allocation2 + $0x20] sm:$0xf]
      %v1483 = vld [vmem:[#allocation2 + $0x24] sm:$0xff]
      %v1484 = vld [vmem:[#allocation2 + $0x2c] sm:$0xf]
      %v1485 = vld [vmem:[#allocation2 + $0x30] sm:$0xff]
      %v1486 = vld [vmem:[#allocation2 + $0x38] sm:$0xf]
      %v1487 = vld [vmem:[#allocation2 + $0x3c] sm:$0xff]
      %v1488 = vld [vmem:[#allocation2 + $0x44] sm:$0xf]
      %v1489 = vld [vmem:[#allocation2 + $0x48] sm:$0xff]
      %v1490 = vld [vmem:[#allocation2 + $0x50] sm:$0xf]
      %v1491 = vld [vmem:[#allocation2 + $0x54] sm:$0xff]
      %v1492 = vld [vmem:[#allocation2 + $0x5c] sm:$0xf]
      %v1493 = vld [vmem:[#allocation2 + $0x60] sm:$0xff]
      %v1494 = vld [vmem:[#allocation2 + $0x68] sm:$0xf]
      %v1495 = vld [vmem:[#allocation2 + $0x6c] sm:$0xff]
      %v1496 = vld [vmem:[#allocation2 + $0x74] sm:$0xf]
      %v1497 = vld [vmem:[#allocation2 + $0x78] sm:$0xff]
      %v1498 = vld [vmem:[#allocation2 + $0x80] sm:$0xf]
      %v1499 = vld [vmem:[#allocation2 + $0x84] sm:$0xff]
      %v1500 = vld [vmem:[#allocation2 + $0x8c] sm:$0xf]
      %v1501 = vld [vmem:[#allocation2 + $0x90] sm:$0xff]
      %v1502 = vld [vmem:[#allocation2 + $0x98] sm:$0xf]
      %v1503 = vld [vmem:[#allocation2 + $0x9c] sm:$0xff]
      %v1504 = vld [vmem:[#allocation2 + $0xa4] sm:$0xf]
      %v1505 = vld [vmem:[#allocation2 + $0xa8] sm:$0xff]
      %v1506 = vld [vmem:[#allocation2 + $0xb0] sm:$0xf]
      %v1507 = vld [vmem:[#allocation2 + $0xb4] sm:$0xff]
      %v1508 = vld [vmem:[#allocation2 + $0xbc] sm:$0xf]
      %v1509 = vld [vmem:[%s2] sm:$0xf]
      %v1510 = vld [vmem:[%s2 + $0x4] sm:$0xf]
      %v1511 = vld [vmem:[%s2 + $0x8] sm:$0xf]
      %v1512 = vld [vmem:[%s2 + $0xc] sm:$0xf]
      %v1513 = vld [vmem:[%s2 + $0x10] sm:$0xf]
      %v1514 = vld [vmem:[%s2 + $0x14] sm:$0xf]
      %v1515 = vld [vmem:[%s2 + $0x18] sm:$0xf]
      %v1516 = vld [vmem:[%s2 + $0x1c] sm:$0xf]
      %v1517 = vld [vmem:[%s2 + $0x20] sm:$0xf]
      %v1518 = vld [vmem:[%s2 + $0x24] sm:$0xf]
      %v1519 = vld [vmem:[%s2 + $0x28] sm:$0xf]
      %v1520 = vld [vmem:[%s2 + $0x2c] sm:$0xf]
      %v1521 = vld [vmem:[%s2 + $0x30] sm:$0xf]
      %v1522 = vld [vmem:[%s2 + $0x34] sm:$0xf]
      %v1523 = vld [vmem:[%s2 + $0x38] sm:$0xf]
      %v1524 = vld [vmem:[%s2 + $0x3c] sm:$0xf]
      %v1525 = vld [vmem:[%s2 + $0x40] sm:$0xf]
      %v1526 = vld [vmem:[%s2 + $0x44] sm:$0xf]
      %v1527 = vld [vmem:[%s2 + $0x48] sm:$0xf]
      %v1528 = vld [vmem:[%s2 + $0x4c] sm:$0xf]
      %v1529 = vld [vmem:[%s2 + $0x50] sm:$0xf]
      %v1530 = vld [vmem:[%s2 + $0x54] sm:$0xf]
      %v1531 = vld [vmem:[%s2 + $0x58] sm:$0xf]
      %v1532 = vld [vmem:[%s2 + $0x5c] sm:$0xf]
      %v1533 = vld [vmem:[%s2 + $0x60] sm:$0xf]
      %v1534 = vld [vmem:[%s2 + $0x64] sm:$0xf]
      %v1535 = vld [vmem:[%s2 + $0x68] sm:$0xf]
      %v1536 = vld [vmem:[%s2 + $0x6c] sm:$0xf]
      %v1537 = vld [vmem:[%s2 + $0x70] sm:$0xf]
      %v1538 = vld [vmem:[%s2 + $0x74] sm:$0xf]
      %v1539 = vld [vmem:[%s2 + $0x78] sm:$0xf]
      %v1540 = vld [vmem:[%s2 + $0x7c] sm:$0xf]
      %v1541 = vld [vmem:[%s2 + $0x80] sm:$0xf]
      %v1542 = vld [vmem:[%s2 + $0x84] sm:$0xf]
      %v1543 = vld [vmem:[%s2 + $0x88] sm:$0xf]
      %v1544 = vld [vmem:[%s2 + $0x8c] sm:$0xf]
      %v1545 = vld [vmem:[%s2 + $0x90] sm:$0xf]
      %v1546 = vld [vmem:[%s2 + $0x94] sm:$0xf]
      %v1547 = vld [vmem:[%s2 + $0x98] sm:$0xf]
      %v1548 = vld [vmem:[%s2 + $0x9c] sm:$0xf]
      %v1549 = vld [vmem:[%s2 + $0xa0] sm:$0xf]
      %v1550 = vld [vmem:[%s2 + $0xa4] sm:$0xf]
      %v1551 = vld [vmem:[%s2 + $0xa8] sm:$0xf]
      %v1552 = vld [vmem:[%s2 + $0xac] sm:$0xf]
      %v1553 = vld [vmem:[%s2 + $0xb0] sm:$0xf]
      %v1554 = vld [vmem:[%s2 + $0xb4] sm:$0xf]
      %v1555 = vld [vmem:[%s2 + $0xb8] sm:$0xf]
      %v1556 = vld [vmem:[%s2 + $0xbc] sm:$0xf]
      %v1557 = vld [vmem:[#allocation2 + $0xc0] sm:$0xff]
      %v1558 = vld [vmem:[#allocation2 + $0xc8] sm:$0xf]
      %v1559 = vld [vmem:[#allocation2 + $0xcc] sm:$0xff]
      %v1560 = vld [vmem:[#allocation2 + $0xd4] sm:$0xf]
      %s1561 = scalar_lea.vmem %s2, 192
      %v1562 = vld [vmem:[%s1561] sm:$0xf]
      %v1563 = vld [vmem:[%s1561 + $0x4] sm:$0xf]
      %v1564 = vld [vmem:[%s1561 + $0x8] sm:$0xf]
      %v1565 = vld [vmem:[%s1561 + $0xc] sm:$0xf]
      %v1566 = vld [vmem:[%s1561 + $0x10] sm:$0xf]
      %v1567 = vld [vmem:[%s1561 + $0x14] sm:$0xf]
      %v1568 = vld [vmem:[%s1561 + $0x18] sm:$0xf]
      %v1569 = vld [vmem:[%s1561 + $0x1c] sm:$0xf]
      %v1570 = vld [vmem:[%s1561 + $0x20] sm:$0xf]
      %v1571 = vld [vmem:[%s1561 + $0x24] sm:$0xf]
      %v1572 = vld [vmem:[%s1561 + $0x28] sm:$0xf]
      %v1573 = vld [vmem:[%s1561 + $0x2c] sm:$0xf]
      %v1574 = vld [vmem:[%s1561 + $0x30] sm:$0xf]
      %v1575 = vld [vmem:[%s1561 + $0x34] sm:$0xf]
      %v1576 = vld [vmem:[%s1561 + $0x38] sm:$0xf]
      %v1577 = vld [vmem:[%s1561 + $0x3c] sm:$0xf]
      %v1578 = vld [vmem:[%s1561 + $0x40] sm:$0xf]
      %v1579 = vld [vmem:[%s1561 + $0x44] sm:$0xf]
      %v1580 = vld [vmem:[%s1561 + $0x48] sm:$0xf]
      %v1581 = vld [vmem:[%s1561 + $0x4c] sm:$0xf]
      %v1582 = vld [vmem:[%s1561 + $0x50] sm:$0xf]
      %v1583 = vld [vmem:[%s1561 + $0x54] sm:$0xf]
      %v1584 = vld [vmem:[%s1561 + $0x58] sm:$0xf]
      %v1585 = vld [vmem:[%s1561 + $0x5c] sm:$0xf]
      %v1586 = vld [vmem:[%s1561 + $0x60] sm:$0xf]
      %v1587 = vld [vmem:[%s1561 + $0x64] sm:$0xf]
      %v1588 = vld [vmem:[%s1561 + $0x68] sm:$0xf]
      %v1589 = vld [vmem:[%s1561 + $0x6c] sm:$0xf]
      %v1590 = vld [vmem:[%s1561 + $0x70] sm:$0xf]
      %v1591 = vld [vmem:[%s1561 + $0x74] sm:$0xf]
      %v1592 = vld [vmem:[%s1561 + $0x78] sm:$0xf]
      %v1593 = vld [vmem:[%s1561 + $0x7c] sm:$0xf]
      %v1594 = vld [vmem:[%s1561 + $0x80] sm:$0xf]
      %v1595 = vld [vmem:[%s1561 + $0x84] sm:$0xf]
      %v1596 = vld [vmem:[%s1561 + $0x88] sm:$0xf]
      %v1597 = vld [vmem:[%s1561 + $0x8c] sm:$0xf]
      %v1598 = vld [vmem:[%s1561 + $0x90] sm:$0xf]
      %v1599 = vld [vmem:[%s1561 + $0x94] sm:$0xf]
      %v1600 = vld [vmem:[%s1561 + $0x98] sm:$0xf]
      %v1601 = vld [vmem:[%s1561 + $0x9c] sm:$0xf]
      %v1602 = vld [vmem:[%s1561 + $0xa0] sm:$0xf]
      %v1603 = vld [vmem:[%s1561 + $0xa4] sm:$0xf]
      %v1604 = vld [vmem:[%s1561 + $0xa8] sm:$0xf]
      %v1605 = vld [vmem:[%s1561 + $0xac] sm:$0xf]
      %v1606 = vld [vmem:[%s1561 + $0xb0] sm:$0xf]
      %v1607 = vld [vmem:[%s1561 + $0xb4] sm:$0xf]
      %v1608 = vld [vmem:[%s1561 + $0xb8] sm:$0xf]
      %v1609 = vld [vmem:[%s1561 + $0xbc] sm:$0xf]
      %v1642 = vunpack.c.l.b16 %v1481
      %v1643 = vunpack.c.h.b16 %v1481
      %v1644 = vunpack.c.l.b16 %v1482
      %v1645 = vunpack.c.l.b16 %v1483
      %v1646 = vunpack.c.h.b16 %v1483
      %v1647 = vunpack.c.l.b16 %v1484
      %v1648 = vunpack.c.l.b16 %v1485
      %v1649 = vunpack.c.h.b16 %v1485
      %v1650 = vunpack.c.l.b16 %v1486
      %v1651 = vunpack.c.l.b16 %v1487
      %v1652 = vunpack.c.h.b16 %v1487
      %v1653 = vunpack.c.l.b16 %v1488
      %v1654 = vunpack.c.l.b16 %v1489
      %v1655 = vunpack.c.h.b16 %v1489
      %v1656 = vunpack.c.l.b16 %v1490
      %v1657 = vunpack.c.l.b16 %v1491
      %v1658 = vunpack.c.h.b16 %v1491
      %v1659 = vunpack.c.l.b16 %v1492
      %v1660 = vunpack.c.l.b16 %v1493
      %v1661 = vunpack.c.h.b16 %v1493
      %v1662 = vunpack.c.l.b16 %v1494
      %v1663 = vunpack.c.l.b16 %v1495
      %v1664 = vunpack.c.h.b16 %v1495
      %v1665 = vunpack.c.l.b16 %v1496
      %v1666 = vunpack.c.l.b16 %v1497
      %v1667 = vunpack.c.h.b16 %v1497
      %v1668 = vunpack.c.l.b16 %v1498
      %v1669 = vunpack.c.l.b16 %v1499
      %v1670 = vunpack.c.h.b16 %v1499
      %v1671 = vunpack.c.l.b16 %v1500
      %v1672 = vunpack.c.l.b16 %v1501
      %v1673 = vunpack.c.h.b16 %v1501
      %v1674 = vunpack.c.l.b16 %v1502
      %v1675 = vunpack.c.l.b16 %v1503
      %v1676 = vunpack.c.h.b16 %v1503
      %v1677 = vunpack.c.l.b16 %v1504
      %v1678 = vunpack.c.l.b16 %v1505
      %v1679 = vunpack.c.h.b16 %v1505
      %v1680 = vunpack.c.l.b16 %v1506
      %v1681 = vunpack.c.l.b16 %v1507
      %v1682 = vunpack.c.h.b16 %v1507
      %v1683 = vunpack.c.l.b16 %v1508
      %v1684 = vunpack.c.l.b16 %v1557
      %v1685 = vunpack.c.h.b16 %v1557
      %v1686 = vunpack.c.l.b16 %v1558
      %v1687 = vunpack.c.l.b16 %v1559
      %v1688 = vunpack.c.h.b16 %v1559
      %v1689 = vunpack.c.l.b16 %v1560
      %v1690 = vpack.c.b16 %v1645, %v1642
      %v1691 = vpack.c.b16 %v1646, %v1643
      %v1692 = vpack.c.b16 %v1647, %v1644
      %v1693 = vpack.c.b16 %v1651, %v1648
      %v1694 = vpack.c.b16 %v1652, %v1649
      %v1695 = vpack.c.b16 %v1653, %v1650
      %v1696 = vpack.c.b16 %v1657, %v1654
      %v1697 = vpack.c.b16 %v1658, %v1655
      %v1698 = vpack.c.b16 %v1659, %v1656
      %v1699 = vpack.c.b16 %v1663, %v1660
      %v1700 = vpack.c.b16 %v1664, %v1661
      %v1701 = vpack.c.b16 %v1665, %v1662
      %v1702 = vpack.c.b16 %v1669, %v1666
      %v1703 = vpack.c.b16 %v1670, %v1667
      %v1704 = vpack.c.b16 %v1671, %v1668
      %v1705 = vpack.c.b16 %v1675, %v1672
      %v1706 = vpack.c.b16 %v1676, %v1673
      %v1707 = vpack.c.b16 %v1677, %v1674
      %v1708 = vpack.c.b16 %v1681, %v1678
      %v1709 = vpack.c.b16 %v1682, %v1679
      %v1710 = vpack.c.b16 %v1683, %v1680
      %v1711 = vpack.c.b16 %v1687, %v1684
      %v1712 = vpack.c.b16 %v1688, %v1685
      %v1713 = vpack.c.b16 %v1689, %v1686
      %v1786 = vunpack.c.l.b16 %v1562
      %v1787 = vunpack.c.l.b16 %v1563
      %v1788 = vunpack.c.l.b16 %v1564
      %v1789 = vunpack.c.l.b16 %v1565
      %v1790 = vunpack.c.l.b16 %v1566
      %v1791 = vunpack.c.l.b16 %v1567
      %v1792 = vunpack.c.l.b16 %v1568
      %v1793 = vunpack.c.l.b16 %v1569
      %v1794 = vunpack.c.l.b16 %v1570
      %v1795 = vunpack.c.l.b16 %v1571
      %v1796 = vunpack.c.l.b16 %v1572
      %v1797 = vunpack.c.l.b16 %v1573
      %v1798 = vunpack.c.l.b16 %v1574
      %v1799 = vunpack.c.l.b16 %v1575
      %v1800 = vunpack.c.l.b16 %v1576
      %v1801 = vunpack.c.l.b16 %v1577
      %v1802 = vunpack.c.l.b16 %v1578
      %v1803 = vunpack.c.l.b16 %v1579
      %v1804 = vunpack.c.l.b16 %v1580
      %v1805 = vunpack.c.l.b16 %v1581
      %v1806 = vunpack.c.l.b16 %v1582
      %v1807 = vunpack.c.l.b16 %v1583
      %v1808 = vunpack.c.l.b16 %v1584
      %v1809 = vunpack.c.l.b16 %v1585
      %v1810 = vunpack.c.l.b16 %v1586
      %v1811 = vunpack.c.l.b16 %v1587
      %v1812 = vunpack.c.l.b16 %v1588
      %v1813 = vunpack.c.l.b16 %v1589
      %v1814 = vunpack.c.l.b16 %v1590
      %v1815 = vunpack.c.l.b16 %v1591
      %v1816 = vunpack.c.l.b16 %v1592
      %v1817 = vunpack.c.l.b16 %v1593
      %v1818 = vunpack.c.l.b16 %v1594
      %v1819 = vunpack.c.l.b16 %v1595
      %v1820 = vunpack.c.l.b16 %v1596
      %v1821 = vunpack.c.l.b16 %v1597
      %v1822 = vunpack.c.l.b16 %v1598
      %v1823 = vunpack.c.l.b16 %v1599
      %v1824 = vunpack.c.l.b16 %v1600
      %v1825 = vunpack.c.l.b16 %v1601
      %v1826 = vunpack.c.l.b16 %v1602
      %v1827 = vunpack.c.l.b16 %v1603
      %v1828 = vunpack.c.l.b16 %v1604
      %v1829 = vunpack.c.l.b16 %v1605
      %v1830 = vunpack.c.l.b16 %v1606
      %v1831 = vunpack.c.l.b16 %v1607
      %v1832 = vunpack.c.l.b16 %v1608
      %v1833 = vunpack.c.l.b16 %v1609
      %v1834 = vpack.c.b16 %v1787, %v1786
      %v1835 = vpack.c.b16 %v1789, %v1788
      %v1836 = vpack.c.b16 %v1791, %v1790
      %v1837 = vpack.c.b16 %v1793, %v1792
      %v1838 = vpack.c.b16 %v1795, %v1794
      %v1839 = vpack.c.b16 %v1797, %v1796
      %v1840 = vpack.c.b16 %v1799, %v1798
      %v1841 = vpack.c.b16 %v1801, %v1800
      %v1842 = vpack.c.b16 %v1803, %v1802
      %v1843 = vpack.c.b16 %v1805, %v1804
      %v1844 = vpack.c.b16 %v1807, %v1806
      %v1845 = vpack.c.b16 %v1809, %v1808
      %v1846 = vpack.c.b16 %v1811, %v1810
      %v1847 = vpack.c.b16 %v1813, %v1812
      %v1848 = vpack.c.b16 %v1815, %v1814
      %v1849 = vpack.c.b16 %v1817, %v1816
      %v1850 = vpack.c.b16 %v1819, %v1818
      %v1851 = vpack.c.b16 %v1821, %v1820
      %v1852 = vpack.c.b16 %v1823, %v1822
      %v1853 = vpack.c.b16 %v1825, %v1824
      %v1854 = vpack.c.b16 %v1827, %v1826
      %v1855 = vpack.c.b16 %v1829, %v1828
      %v1856 = vpack.c.b16 %v1831, %v1830
      %v1857 = vpack.c.b16 %v1833, %v1832
      %1882 = vmatprep.subr.bf16.mxu0 0
      %1883 = vmatpush1.bf16.msra.mxu0 %v1841
      %1884 = vmatprep.subr.bf16.mxu0 0
      %1885 = vmatpush1.bf16.msra.mxu0 %v1840
      %1886 = vmatprep.subr.bf16.mxu0 0
      %1887 = vmatpush1.bf16.msra.mxu0 %v1839
      %1888 = vmatprep.subr.bf16.mxu0 0
      %1889 = vmatpush1.bf16.msra.mxu0 %v1838
      %1890 = vmatprep.subr.bf16.mxu0 0
      %1891 = vmatpush1.bf16.msra.mxu0 %v1837
      %1892 = vmatprep.subr.bf16.mxu0 0
      %1893 = vmatpush1.bf16.msra.mxu0 %v1836
      %1894 = vmatprep.subr.bf16.mxu0 0
      %1895 = vmatpush1.bf16.msra.mxu0 %v1835
      %1896 = vmatprep.subr.bf16.mxu0 0
      %1897 = vmatpush1.bf16.msra.mxu0 %v1834
      %1898 = vmatprep.subr.bf16.mxu0 0
      %1899 = vmatpush2.bf16.msra.mxu0 %v1849
      %1900 = vmatprep.subr.bf16.mxu0 0
      %1901 = vmatpush2.bf16.msra.mxu0 %v1848
      %1902 = vmatprep.subr.bf16.mxu0 0
      %1903 = vmatpush2.bf16.msra.mxu0 %v1847
      %1904 = vmatprep.subr.bf16.mxu0 0
      %1905 = vmatpush2.bf16.msra.mxu0 %v1846
      %1906 = vmatprep.subr.bf16.mxu0 0
      %1907 = vmatpush2.bf16.msra.mxu0 %v1845
      %1908 = vmatprep.subr.bf16.mxu0 0
      %1909 = vmatpush2.bf16.msra.mxu0 %v1844
      %1910 = vmatprep.subr.bf16.mxu0 0
      %1911 = vmatpush2.bf16.msra.mxu0 %v1843
      %1912 = vmatprep.subr.bf16.mxu0 0
      %1913 = vmatpush2.bf16.msra.mxu0 %v1842
      %1914 = vmatprep.mubr.bf16.mxu0 %v1691
      %1915 = vmatmul.mubr.bf16.gmra.mxu0 %v1690
      %v1916 = vpop.f32.mrf.mxu0
      %v1917 = vadd.f32 0.0, %v1916
      %v1918 = vpop.f32.mrf.mxu0
      %v1919 = vpop.f32.mrf.mxu0
      %v1920 = vadd.f32 0.0, %v1919
      %v1921 = vpop.f32.mrf.mxu0
      %1922 = vmatprep.mubr.bf16.mxu0 %v1694
      %1923 = vmatmul.mubr.bf16.gmra.mxu0 %v1693
      %v1924 = vpop.f32.mrf.mxu0
      %v1925 = vadd.f32 0.0, %v1924
      %v1926 = vpop.f32.mrf.mxu0
      %v1927 = vpop.f32.mrf.mxu0
      %v1928 = vadd.f32 0.0, %v1927
      %v1929 = vpop.f32.mrf.mxu0
      %1930 = vmatprep.mubr.bf16.mxu0 %v1697
      %1931 = vmatmul.mubr.bf16.gmra.mxu0 %v1696
      %v1932 = vpop.f32.mrf.mxu0
      %v1933 = vadd.f32 0.0, %v1932
      %v1934 = vpop.f32.mrf.mxu0
      %v1935 = vpop.f32.mrf.mxu0
      %v1936 = vadd.f32 0.0, %v1935
      %v1937 = vpop.f32.mrf.mxu0
      %1938 = vmatprep.mubr.bf16.mxu0 %v1700
      %1939 = vmatmul.mubr.bf16.gmra.mxu0 %v1699
      %v1940 = vpop.f32.mrf.mxu0
      %v1941 = vadd.f32 0.0, %v1940
      %v1942 = vpop.f32.mrf.mxu0
      %v1943 = vpop.f32.mrf.mxu0
      %v1944 = vadd.f32 0.0, %v1943
      %v1945 = vpop.f32.mrf.mxu0
      %1946 = vmatprep.mubr.bf16.mxu0 %v1703
      %1947 = vmatmul.mubr.bf16.gmra.mxu0 %v1702
      %v1948 = vpop.f32.mrf.mxu0
      %v1949 = vadd.f32 0.0, %v1948
      %v1950 = vpop.f32.mrf.mxu0
      %v1951 = vpop.f32.mrf.mxu0
      %v1952 = vadd.f32 0.0, %v1951
      %v1953 = vpop.f32.mrf.mxu0
      %1954 = vmatprep.mubr.bf16.mxu0 %v1706
      %1955 = vmatmul.mubr.bf16.gmra.mxu0 %v1705
      %v1956 = vpop.f32.mrf.mxu0
      %v1957 = vadd.f32 0.0, %v1956
      %v1958 = vpop.f32.mrf.mxu0
      %v1959 = vpop.f32.mrf.mxu0
      %v1960 = vadd.f32 0.0, %v1959
      %v1961 = vpop.f32.mrf.mxu0
      %1962 = vmatprep.mubr.bf16.mxu0 %v1709
      %1963 = vmatmul.mubr.bf16.gmra.mxu0 %v1708
      %v1964 = vpop.f32.mrf.mxu0
      %v1965 = vadd.f32 0.0, %v1964
      %v1966 = vpop.f32.mrf.mxu0
      %v1967 = vpop.f32.mrf.mxu0
      %v1968 = vadd.f32 0.0, %v1967
      %v1969 = vpop.f32.mrf.mxu0
      %1970 = vmatprep.mubr.bf16.mxu0 %v1712
      %1971 = vmatmul.mubr.bf16.gmra.mxu0 %v1711
      %v1972 = vpop.f32.mrf.mxu0
      %v1973 = vadd.f32 0.0, %v1972
      %v1974 = vpop.f32.mrf.mxu0
      %v1975 = vpop.f32.mrf.mxu0
      %v1976 = vadd.f32 0.0, %v1975
      %v1977 = vpop.f32.mrf.mxu0
      %1978 = vdwg.mxu0
      %1979 = vmatprep.subr.bf16.mxu0 0
      %1980 = vmatpush1.bf16.msra.mxu0 %v1857
      %1981 = vmatprep.subr.bf16.mxu0 0
      %1982 = vmatpush1.bf16.msra.mxu0 %v1856
      %1983 = vmatprep.subr.bf16.mxu0 0
      %1984 = vmatpush1.bf16.msra.mxu0 %v1855
      %1985 = vmatprep.subr.bf16.mxu0 0
      %1986 = vmatpush1.bf16.msra.mxu0 %v1854
      %1987 = vmatprep.subr.bf16.mxu0 0
      %1988 = vmatpush1.bf16.msra.mxu0 %v1853
      %1989 = vmatprep.subr.bf16.mxu0 0
      %1990 = vmatpush1.bf16.msra.mxu0 %v1852
      %1991 = vmatprep.subr.bf16.mxu0 0
      %1992 = vmatpush1.bf16.msra.mxu0 %v1851
      %1993 = vmatprep.subr.bf16.mxu0 0
      %1994 = vmatpush1.bf16.msra.mxu0 %v1850
      %1995 = vmatprep.subr.bf16.mxu0 0
      %1996 = vmatpush2.bf16.msra.mxu0 0
      %1997 = vmatprep.subr.bf16.mxu0 0
      %1998 = vmatpush2.bf16.msra.mxu0 0
      %1999 = vmatprep.subr.bf16.mxu0 0
      %2000 = vmatpush2.bf16.msra.mxu0 0
      %2001 = vmatprep.subr.bf16.mxu0 0
      %2002 = vmatpush2.bf16.msra.mxu0 0
      %2003 = vmatprep.subr.bf16.mxu0 0
      %2004 = vmatpush2.bf16.msra.mxu0 0
      %2005 = vmatprep.subr.bf16.mxu0 0
      %2006 = vmatpush2.bf16.msra.mxu0 0
      %2007 = vmatprep.subr.bf16.mxu0 0
      %2008 = vmatpush2.bf16.msra.mxu0 0
      %2009 = vmatprep.subr.bf16.mxu0 0
      %2010 = vmatpush2.bf16.msra.mxu0 0
      %2011 = vmatprep.mubr.bf16.mxu0 0
      %2012 = vmatmul.mubr.bf16.gmra.mxu0 %v1692
      %v2013 = vpop.f32.mrf.mxu0
      %v2014 = vadd.f32 %v1917, %v2013
      %v2015 = vpop.f32.mrf.mxu0
      %v2016 = vpop.f32.mrf.mxu0
      %v2017 = vadd.f32 %v1920, %v2016
      %v2018 = vpop.f32.mrf.mxu0
      %2019 = vmatprep.mubr.bf16.mxu0 0
      %2020 = vmatmul.mubr.bf16.gmra.mxu0 %v1695
      %v2021 = vpop.f32.mrf.mxu0
      %v2022 = vadd.f32 %v1925, %v2021
      %v2023 = vpop.f32.mrf.mxu0
      %v2024 = vpop.f32.mrf.mxu0
      %v2025 = vadd.f32 %v1928, %v2024
      %v2026 = vpop.f32.mrf.mxu0
      %2027 = vmatprep.mubr.bf16.mxu0 0
      %2028 = vmatmul.mubr.bf16.gmra.mxu0 %v1698
      %v2029 = vpop.f32.mrf.mxu0
      %v2030 = vadd.f32 %v1933, %v2029
      %v2031 = vpop.f32.mrf.mxu0
      %v2032 = vpop.f32.mrf.mxu0
      %v2033 = vadd.f32 %v1936, %v2032
      %v2034 = vpop.f32.mrf.mxu0
      %2035 = vmatprep.mubr.bf16.mxu0 0
      %2036 = vmatmul.mubr.bf16.gmra.mxu0 %v1701
      %v2037 = vpop.f32.mrf.mxu0
      %v2038 = vadd.f32 %v1941, %v2037
      %v2039 = vpop.f32.mrf.mxu0
      %v2040 = vpop.f32.mrf.mxu0
      %v2041 = vadd.f32 %v1944, %v2040
      %v2042 = vpop.f32.mrf.mxu0
      %2043 = vmatprep.mubr.bf16.mxu0 0
      %2044 = vmatmul.mubr.bf16.gmra.mxu0 %v1704
      %v2045 = vpop.f32.mrf.mxu0
      %v2046 = vadd.f32 %v1949, %v2045
      %v2047 = vpop.f32.mrf.mxu0
      %v2048 = vpop.f32.mrf.mxu0
      %v2049 = vadd.f32 %v1952, %v2048
      %v2050 = vpop.f32.mrf.mxu0
      %2051 = vmatprep.mubr.bf16.mxu0 0
      %2052 = vmatmul.mubr.bf16.gmra.mxu0 %v1707
      %v2053 = vpop.f32.mrf.mxu0
      %v2054 = vadd.f32 %v1957, %v2053
      %v2055 = vpop.f32.mrf.mxu0
      %v2056 = vpop.f32.mrf.mxu0
      %v2057 = vadd.f32 %v1960, %v2056
      %v2058 = vpop.f32.mrf.mxu0
      %2059 = vmatprep.mubr.bf16.mxu0 0
      %2060 = vmatmul.mubr.bf16.gmra.mxu0 %v1710
      %v2061 = vpop.f32.mrf.mxu0
      %v2062 = vadd.f32 %v1965, %v2061
      %v2063 = vpop.f32.mrf.mxu0
      %v2064 = vpop.f32.mrf.mxu0
      %v2065 = vadd.f32 %v1968, %v2064
      %v2066 = vpop.f32.mrf.mxu0
      %2067 = vmatprep.mubr.bf16.mxu0 0
      %2068 = vmatmul.mubr.bf16.gmra.mxu0 %v1713
      %v2069 = vpop.f32.mrf.mxu0
      %v2070 = vadd.f32 %v1973, %v2069
      %v2071 = vpop.f32.mrf.mxu0
      %v2072 = vpop.f32.mrf.mxu0
      %v2073 = vadd.f32 %v1976, %v2072
      %v2074 = vpop.f32.mrf.mxu0
      %2075 = vdwg.mxu0
      %v2080 = vunpack.c.l.b16 %v1477
      %v2081 = vunpack.c.h.b16 %v1477
      %v2082 = vunpack.c.l.b16 %v1478
      %v2083 = vunpack.c.l.b16 %v1479
      %v2084 = vunpack.c.h.b16 %v1479
      %v2085 = vunpack.c.l.b16 %v1480
      %v2086 = vpack.c.b16 %v2083, %v2080
      %v2087 = vpack.c.b16 %v2084, %v2081
      %v2088 = vpack.c.b16 %v2085, %v2082
      %v2140 = vunpack.c.l.b16 %v1509
      %v2141 = vunpack.c.l.b16 %v1510
      %v2142 = vunpack.c.l.b16 %v1511
      %v2143 = vunpack.c.l.b16 %v1512
      %v2144 = vunpack.c.l.b16 %v1513
      %v2145 = vunpack.c.l.b16 %v1514
      %v2146 = vunpack.c.l.b16 %v1515
      %v2147 = vunpack.c.l.b16 %v1516
      %v2148 = vunpack.c.l.b16 %v1517
      %v2149 = vunpack.c.l.b16 %v1518
      %v2150 = vunpack.c.l.b16 %v1519
      %v2151 = vunpack.c.l.b16 %v1520
      %v2152 = vunpack.c.l.b16 %v1521
      %v2153 = vunpack.c.l.b16 %v1522
      %v2154 = vunpack.c.l.b16 %v1523
      %v2155 = vunpack.c.l.b16 %v1524
      %v2156 = vunpack.c.l.b16 %v1525
      %v2157 = vunpack.c.l.b16 %v1526
      %v2158 = vunpack.c.l.b16 %v1527
      %v2159 = vunpack.c.l.b16 %v1528
      %v2160 = vunpack.c.l.b16 %v1529
      %v2161 = vunpack.c.l.b16 %v1530
      %v2162 = vunpack.c.l.b16 %v1531
      %v2163 = vunpack.c.l.b16 %v1532
      %v2164 = vunpack.c.l.b16 %v1533
      %v2165 = vunpack.c.l.b16 %v1534
      %v2166 = vunpack.c.l.b16 %v1535
      %v2167 = vunpack.c.l.b16 %v1536
      %v2168 = vunpack.c.l.b16 %v1537
      %v2169 = vunpack.c.l.b16 %v1538
      %v2170 = vunpack.c.l.b16 %v1539
      %v2171 = vunpack.c.l.b16 %v1540
      %v2172 = vunpack.c.l.b16 %v1541
      %v2173 = vunpack.c.l.b16 %v1542
      %v2174 = vunpack.c.l.b16 %v1543
      %v2175 = vunpack.c.l.b16 %v1544
      %v2176 = vunpack.c.l.b16 %v1545
      %v2177 = vunpack.c.l.b16 %v1546
      %v2178 = vunpack.c.l.b16 %v1547
      %v2179 = vunpack.c.l.b16 %v1548
      %v2180 = vunpack.c.l.b16 %v1549
      %v2181 = vunpack.c.l.b16 %v1550
      %v2182 = vunpack.c.l.b16 %v1551
      %v2183 = vunpack.c.l.b16 %v1552
      %v2184 = vunpack.c.l.b16 %v1553
      %v2185 = vunpack.c.l.b16 %v1554
      %v2186 = vunpack.c.l.b16 %v1555
      %v2187 = vunpack.c.l.b16 %v1556
      %v2188 = vpack.c.b16 %v2141, %v2140
      %v2189 = vpack.c.b16 %v2143, %v2142
      %v2190 = vpack.c.b16 %v2145, %v2144
      %v2191 = vpack.c.b16 %v2147, %v2146
      %v2192 = vpack.c.b16 %v2149, %v2148
      %v2193 = vpack.c.b16 %v2151, %v2150
      %v2194 = vpack.c.b16 %v2153, %v2152
      %v2195 = vpack.c.b16 %v2155, %v2154
      %v2196 = vpack.c.b16 %v2157, %v2156
      %v2197 = vpack.c.b16 %v2159, %v2158
      %v2198 = vpack.c.b16 %v2161, %v2160
      %v2199 = vpack.c.b16 %v2163, %v2162
      %v2200 = vpack.c.b16 %v2165, %v2164
      %v2201 = vpack.c.b16 %v2167, %v2166
      %v2202 = vpack.c.b16 %v2169, %v2168
      %v2203 = vpack.c.b16 %v2171, %v2170
      %v2204 = vpack.c.b16 %v2173, %v2172
      %v2205 = vpack.c.b16 %v2175, %v2174
      %v2206 = vpack.c.b16 %v2177, %v2176
      %v2207 = vpack.c.b16 %v2179, %v2178
      %v2208 = vpack.c.b16 %v2181, %v2180
      %v2209 = vpack.c.b16 %v2183, %v2182
      %v2210 = vpack.c.b16 %v2185, %v2184
      %v2211 = vpack.c.b16 %v2187, %v2186
      %2236 = vmatprep.subr.bf16.mxu0 0
      %2237 = vmatpush1.bf16.msra.mxu0 %v2195
      %2238 = vmatprep.subr.bf16.mxu0 0
      %2239 = vmatpush1.bf16.msra.mxu0 %v2194
      %2240 = vmatprep.subr.bf16.mxu0 0
      %2241 = vmatpush1.bf16.msra.mxu0 %v2193
      %2242 = vmatprep.subr.bf16.mxu0 0
      %2243 = vmatpush1.bf16.msra.mxu0 %v2192
      %2244 = vmatprep.subr.bf16.mxu0 0
      %2245 = vmatpush1.bf16.msra.mxu0 %v2191
      %2246 = vmatprep.subr.bf16.mxu0 0
      %2247 = vmatpush1.bf16.msra.mxu0 %v2190
      %2248 = vmatprep.subr.bf16.mxu0 0
      %2249 = vmatpush1.bf16.msra.mxu0 %v2189
      %2250 = vmatprep.subr.bf16.mxu0 0
      %2251 = vmatpush1.bf16.msra.mxu0 %v2188
      %2252 = vmatprep.subr.bf16.mxu0 0
      %2253 = vmatpush2.bf16.msra.mxu0 %v2203
      %2254 = vmatprep.subr.bf16.mxu0 0
      %2255 = vmatpush2.bf16.msra.mxu0 %v2202
      %2256 = vmatprep.subr.bf16.mxu0 0
      %2257 = vmatpush2.bf16.msra.mxu0 %v2201
      %2258 = vmatprep.subr.bf16.mxu0 0
      %2259 = vmatpush2.bf16.msra.mxu0 %v2200
      %2260 = vmatprep.subr.bf16.mxu0 0
      %2261 = vmatpush2.bf16.msra.mxu0 %v2199
      %2262 = vmatprep.subr.bf16.mxu0 0
      %2263 = vmatpush2.bf16.msra.mxu0 %v2198
      %2264 = vmatprep.subr.bf16.mxu0 0
      %2265 = vmatpush2.bf16.msra.mxu0 %v2197
      %2266 = vmatprep.subr.bf16.mxu0 0
      %2267 = vmatpush2.bf16.msra.mxu0 %v2196
      %2268 = vmatprep.mubr.bf16.mxu0 %v2087
      %2269 = vmatmul.mubr.bf16.gmra.mxu0 %v2086
      %v2270 = vpop.f32.mrf.mxu0
      %v2271 = vadd.f32 %v2014, %v2270
      %v2272 = vpop.f32.mrf.mxu0
      %v2273 = vpop.f32.mrf.mxu0
      %v2274 = vadd.f32 %v2017, %v2273
      %v2275 = vpop.f32.mrf.mxu0
      %2276 = vmatprep.mubr.bf16.mxu0 %v1691
      %2277 = vmatmul.mubr.bf16.gmra.mxu0 %v1690
      %v2278 = vpop.f32.mrf.mxu0
      %v2279 = vadd.f32 %v2022, %v2278
      %v2280 = vpop.f32.mrf.mxu0
      %v2281 = vpop.f32.mrf.mxu0
      %v2282 = vadd.f32 %v2025, %v2281
      %v2283 = vpop.f32.mrf.mxu0
      %2284 = vmatprep.mubr.bf16.mxu0 %v1694
      %2285 = vmatmul.mubr.bf16.gmra.mxu0 %v1693
      %v2286 = vpop.f32.mrf.mxu0
      %v2287 = vadd.f32 %v2030, %v2286
      %v2288 = vpop.f32.mrf.mxu0
      %v2289 = vpop.f32.mrf.mxu0
      %v2290 = vadd.f32 %v2033, %v2289
      %v2291 = vpop.f32.mrf.mxu0
      %2292 = vmatprep.mubr.bf16.mxu0 %v1697
      %2293 = vmatmul.mubr.bf16.gmra.mxu0 %v1696
      %v2294 = vpop.f32.mrf.mxu0
      %v2295 = vadd.f32 %v2038, %v2294
      %v2296 = vpop.f32.mrf.mxu0
      %v2297 = vpop.f32.mrf.mxu0
      %v2298 = vadd.f32 %v2041, %v2297
      %v2299 = vpop.f32.mrf.mxu0
      %2300 = vmatprep.mubr.bf16.mxu0 %v1700
      %2301 = vmatmul.mubr.bf16.gmra.mxu0 %v1699
      %v2302 = vpop.f32.mrf.mxu0
      %v2303 = vadd.f32 %v2046, %v2302
      %v2304 = vpop.f32.mrf.mxu0
      %v2305 = vpop.f32.mrf.mxu0
      %v2306 = vadd.f32 %v2049, %v2305
      %v2307 = vpop.f32.mrf.mxu0
      %2308 = vmatprep.mubr.bf16.mxu0 %v1703
      %2309 = vmatmul.mubr.bf16.gmra.mxu0 %v1702
      %v2310 = vpop.f32.mrf.mxu0
      %v2311 = vadd.f32 %v2054, %v2310
      %v2312 = vpop.f32.mrf.mxu0
      %v2313 = vpop.f32.mrf.mxu0
      %v2314 = vadd.f32 %v2057, %v2313
      %v2315 = vpop.f32.mrf.mxu0
      %2316 = vmatprep.mubr.bf16.mxu0 %v1706
      %2317 = vmatmul.mubr.bf16.gmra.mxu0 %v1705
      %v2318 = vpop.f32.mrf.mxu0
      %v2319 = vadd.f32 %v2062, %v2318
      %v2320 = vpop.f32.mrf.mxu0
      %v2321 = vpop.f32.mrf.mxu0
      %v2322 = vadd.f32 %v2065, %v2321
      %v2323 = vpop.f32.mrf.mxu0
      %2324 = vmatprep.mubr.bf16.mxu0 %v1709
      %2325 = vmatmul.mubr.bf16.gmra.mxu0 %v1708
      %v2326 = vpop.f32.mrf.mxu0
      %v2327 = vadd.f32 %v2070, %v2326
      %v2328 = vpop.f32.mrf.mxu0
      %v2329 = vpop.f32.mrf.mxu0
      %v2330 = vadd.f32 %v2073, %v2329
      %v2331 = vpop.f32.mrf.mxu0
      %2332 = vdwg.mxu0
      %2333 = vmatprep.subr.bf16.mxu0 0
      %2334 = vmatpush1.bf16.msra.mxu0 %v2211
      %2335 = vmatprep.subr.bf16.mxu0 0
      %2336 = vmatpush1.bf16.msra.mxu0 %v2210
      %2337 = vmatprep.subr.bf16.mxu0 0
      %2338 = vmatpush1.bf16.msra.mxu0 %v2209
      %2339 = vmatprep.subr.bf16.mxu0 0
      %2340 = vmatpush1.bf16.msra.mxu0 %v2208
      %2341 = vmatprep.subr.bf16.mxu0 0
      %2342 = vmatpush1.bf16.msra.mxu0 %v2207
      %2343 = vmatprep.subr.bf16.mxu0 0
      %2344 = vmatpush1.bf16.msra.mxu0 %v2206
      %2345 = vmatprep.subr.bf16.mxu0 0
      %2346 = vmatpush1.bf16.msra.mxu0 %v2205
      %2347 = vmatprep.subr.bf16.mxu0 0
      %2348 = vmatpush1.bf16.msra.mxu0 %v2204
      %2349 = vmatprep.subr.bf16.mxu0 0
      %2350 = vmatpush2.bf16.msra.mxu0 0
      %2351 = vmatprep.subr.bf16.mxu0 0
      %2352 = vmatpush2.bf16.msra.mxu0 0
      %2353 = vmatprep.subr.bf16.mxu0 0
      %2354 = vmatpush2.bf16.msra.mxu0 0
      %2355 = vmatprep.subr.bf16.mxu0 0
      %2356 = vmatpush2.bf16.msra.mxu0 0
      %2357 = vmatprep.subr.bf16.mxu0 0
      %2358 = vmatpush2.bf16.msra.mxu0 0
      %2359 = vmatprep.subr.bf16.mxu0 0
      %2360 = vmatpush2.bf16.msra.mxu0 0
      %2361 = vmatprep.subr.bf16.mxu0 0
      %2362 = vmatpush2.bf16.msra.mxu0 0
      %2363 = vmatprep.subr.bf16.mxu0 0
      %2364 = vmatpush2.bf16.msra.mxu0 0
      %2365 = vmatprep.mubr.bf16.mxu0 0
      %2366 = vmatmul.mubr.bf16.gmra.mxu0 %v2088
      %v2367 = vpop.f32.mrf.mxu0
      %v2368 = vadd.f32 %v2271, %v2367
      %v2369 = vpop.f32.mrf.mxu0
      %v2370 = vpop.f32.mrf.mxu0
      %v2371 = vadd.f32 %v2274, %v2370
      %v2372 = vpop.f32.mrf.mxu0
      %2373 = vmatprep.mubr.bf16.mxu0 0
      %2374 = vmatmul.mubr.bf16.gmra.mxu0 %v1692
      %v2375 = vpop.f32.mrf.mxu0
      %v2376 = vadd.f32 %v2279, %v2375
      %v2377 = vpop.f32.mrf.mxu0
      %v2378 = vpop.f32.mrf.mxu0
      %v2379 = vadd.f32 %v2282, %v2378
      %v2380 = vpop.f32.mrf.mxu0
      %2381 = vmatprep.mubr.bf16.mxu0 0
      %2382 = vmatmul.mubr.bf16.gmra.mxu0 %v1695
      %v2383 = vpop.f32.mrf.mxu0
      %v2384 = vadd.f32 %v2287, %v2383
      %v2385 = vpop.f32.mrf.mxu0
      %v2386 = vpop.f32.mrf.mxu0
      %v2387 = vadd.f32 %v2290, %v2386
      %v2388 = vpop.f32.mrf.mxu0
      %2389 = vmatprep.mubr.bf16.mxu0 0
      %2390 = vmatmul.mubr.bf16.gmra.mxu0 %v1698
      %v2391 = vpop.f32.mrf.mxu0
      %v2392 = vadd.f32 %v2295, %v2391
      %v2393 = vpop.f32.mrf.mxu0
      %v2394 = vpop.f32.mrf.mxu0
      %v2395 = vadd.f32 %v2298, %v2394
      %v2396 = vpop.f32.mrf.mxu0
      %2397 = vmatprep.mubr.bf16.mxu0 0
      %2398 = vmatmul.mubr.bf16.gmra.mxu0 %v1701
      %v2399 = vpop.f32.mrf.mxu0
      %v2400 = vadd.f32 %v2303, %v2399
      %v2401 = vpop.f32.mrf.mxu0
      %v2402 = vpop.f32.mrf.mxu0
      %v2403 = vadd.f32 %v2306, %v2402
      %v2404 = vpop.f32.mrf.mxu0
      %2405 = vmatprep.mubr.bf16.mxu0 0
      %2406 = vmatmul.mubr.bf16.gmra.mxu0 %v1704
      %v2407 = vpop.f32.mrf.mxu0
      %v2408 = vadd.f32 %v2311, %v2407
      %v2409 = vpop.f32.mrf.mxu0
      %v2410 = vpop.f32.mrf.mxu0
      %v2411 = vadd.f32 %v2314, %v2410
      %v2412 = vpop.f32.mrf.mxu0
      %2413 = vmatprep.mubr.bf16.mxu0 0
      %2414 = vmatmul.mubr.bf16.gmra.mxu0 %v1707
      %v2415 = vpop.f32.mrf.mxu0
      %v2416 = vadd.f32 %v2319, %v2415
      %v2417 = vpop.f32.mrf.mxu0
      %v2418 = vpop.f32.mrf.mxu0
      %v2419 = vadd.f32 %v2322, %v2418
      %v2420 = vpop.f32.mrf.mxu0
      %2421 = vmatprep.mubr.bf16.mxu0 0
      %2422 = vmatmul.mubr.bf16.gmra.mxu0 %v1710
      %v2423 = vpop.f32.mrf.mxu0
      %v2424 = vadd.f32 %v2327, %v2423
      %v2425 = vpop.f32.mrf.mxu0
      %v2426 = vpop.f32.mrf.mxu0
      %v2427 = vadd.f32 %v2330, %v2426
      %v2428 = vpop.f32.mrf.mxu0
      %2429 = vdwg.mxu0
      %v2430 = vld [vmem:[#allocation2 + $0x30] sm:$0xff]
      %v2431 = vld [vmem:[#allocation2 + $0x38] sm:$0xf]
      %v2432 = vld [vmem:[#allocation2 + $0x3c] sm:$0xff]
      %v2433 = vld [vmem:[#allocation2 + $0x44] sm:$0xf]
      %v2434 = vld [vmem:[#allocation2 + $0x48] sm:$0xff]
      %v2435 = vld [vmem:[#allocation2 + $0x50] sm:$0xf]
      %v2436 = vld [vmem:[#allocation2 + $0x54] sm:$0xff]
      %v2437 = vld [vmem:[#allocation2 + $0x5c] sm:$0xf]
      %v2438 = vld [vmem:[#allocation2 + $0x60] sm:$0xff]
      %v2439 = vld [vmem:[#allocation2 + $0x68] sm:$0xf]
      %v2440 = vld [vmem:[#allocation2 + $0x6c] sm:$0xff]
      %v2441 = vld [vmem:[#allocation2 + $0x74] sm:$0xf]
      %v2442 = vld [vmem:[#allocation2 + $0x78] sm:$0xff]
      %v2443 = vld [vmem:[#allocation2 + $0x80] sm:$0xf]
      %v2444 = vld [vmem:[#allocation2 + $0x84] sm:$0xff]
      %v2445 = vld [vmem:[#allocation2 + $0x8c] sm:$0xf]
      %v2446 = vld [vmem:[#allocation2 + $0x90] sm:$0xff]
      %v2447 = vld [vmem:[#allocation2 + $0x98] sm:$0xf]
      %v2448 = vld [vmem:[#allocation2 + $0x9c] sm:$0xff]
      %v2449 = vld [vmem:[#allocation2 + $0xa4] sm:$0xf]
      %v2450 = vld [vmem:[#allocation2 + $0xa8] sm:$0xff]
      %v2451 = vld [vmem:[#allocation2 + $0xb0] sm:$0xf]
      %v2452 = vld [vmem:[#allocation2 + $0xb4] sm:$0xff]
      %v2453 = vld [vmem:[#allocation2 + $0xbc] sm:$0xf]
      %v2454 = vld [vmem:[#allocation2 + $0xc0] sm:$0xff]
      %v2455 = vld [vmem:[#allocation2 + $0xc8] sm:$0xf]
      %v2456 = vld [vmem:[#allocation2 + $0xcc] sm:$0xff]
      %v2457 = vld [vmem:[#allocation2 + $0xd4] sm:$0xf]
      %v2458 = vld [vmem:[#allocation2 + $0xd8] sm:$0xff]
      %v2459 = vld [vmem:[#allocation2 + $0xe0] sm:$0xf]
      %v2460 = vld [vmem:[#allocation2 + $0xe4] sm:$0xff]
      %v2461 = vld [vmem:[#allocation2 + $0xec] sm:$0xf]
      %s2462 = scalar_lea.vmem %s2, 384
      %v2463 = vld [vmem:[%s2462] sm:$0xf]
      %v2464 = vld [vmem:[%s2462 + $0x4] sm:$0xf]
      %v2465 = vld [vmem:[%s2462 + $0x8] sm:$0xf]
      %v2466 = vld [vmem:[%s2462 + $0xc] sm:$0xf]
      %v2467 = vld [vmem:[%s2462 + $0x10] sm:$0xf]
      %v2468 = vld [vmem:[%s2462 + $0x14] sm:$0xf]
      %v2469 = vld [vmem:[%s2462 + $0x18] sm:$0xf]
      %v2470 = vld [vmem:[%s2462 + $0x1c] sm:$0xf]
      %v2471 = vld [vmem:[%s2462 + $0x20] sm:$0xf]
      %v2472 = vld [vmem:[%s2462 + $0x24] sm:$0xf]
      %v2473 = vld [vmem:[%s2462 + $0x28] sm:$0xf]
      %v2474 = vld [vmem:[%s2462 + $0x2c] sm:$0xf]
      %v2475 = vld [vmem:[%s2462 + $0x30] sm:$0xf]
      %v2476 = vld [vmem:[%s2462 + $0x34] sm:$0xf]
      %v2477 = vld [vmem:[%s2462 + $0x38] sm:$0xf]
      %v2478 = vld [vmem:[%s2462 + $0x3c] sm:$0xf]
      %v2479 = vld [vmem:[%s2462 + $0x40] sm:$0xf]
      %v2480 = vld [vmem:[%s2462 + $0x44] sm:$0xf]
      %v2481 = vld [vmem:[%s2462 + $0x48] sm:$0xf]
      %v2482 = vld [vmem:[%s2462 + $0x4c] sm:$0xf]
      %v2483 = vld [vmem:[%s2462 + $0x50] sm:$0xf]
      %v2484 = vld [vmem:[%s2462 + $0x54] sm:$0xf]
      %v2485 = vld [vmem:[%s2462 + $0x58] sm:$0xf]
      %v2486 = vld [vmem:[%s2462 + $0x5c] sm:$0xf]
      %v2487 = vld [vmem:[%s2462 + $0x60] sm:$0xf]
      %v2488 = vld [vmem:[%s2462 + $0x64] sm:$0xf]
      %v2489 = vld [vmem:[%s2462 + $0x68] sm:$0xf]
      %v2490 = vld [vmem:[%s2462 + $0x6c] sm:$0xf]
      %v2491 = vld [vmem:[%s2462 + $0x70] sm:$0xf]
      %v2492 = vld [vmem:[%s2462 + $0x74] sm:$0xf]
      %v2493 = vld [vmem:[%s2462 + $0x78] sm:$0xf]
      %v2494 = vld [vmem:[%s2462 + $0x7c] sm:$0xf]
      %v2495 = vld [vmem:[%s2462 + $0x80] sm:$0xf]
      %v2496 = vld [vmem:[%s2462 + $0x84] sm:$0xf]
      %v2497 = vld [vmem:[%s2462 + $0x88] sm:$0xf]
      %v2498 = vld [vmem:[%s2462 + $0x8c] sm:$0xf]
      %v2499 = vld [vmem:[%s2462 + $0x90] sm:$0xf]
      %v2500 = vld [vmem:[%s2462 + $0x94] sm:$0xf]
      %v2501 = vld [vmem:[%s2462 + $0x98] sm:$0xf]
      %v2502 = vld [vmem:[%s2462 + $0x9c] sm:$0xf]
      %v2503 = vld [vmem:[%s2462 + $0xa0] sm:$0xf]
      %v2504 = vld [vmem:[%s2462 + $0xa4] sm:$0xf]
      %v2505 = vld [vmem:[%s2462 + $0xa8] sm:$0xf]
      %v2506 = vld [vmem:[%s2462 + $0xac] sm:$0xf]
      %v2507 = vld [vmem:[%s2462 + $0xb0] sm:$0xf]
      %v2508 = vld [vmem:[%s2462 + $0xb4] sm:$0xf]
      %v2509 = vld [vmem:[%s2462 + $0xb8] sm:$0xf]
      %v2510 = vld [vmem:[%s2462 + $0xbc] sm:$0xf]
      %v2543 = vunpack.c.l.b16 %v2430
      %v2544 = vunpack.c.h.b16 %v2430
      %v2545 = vunpack.c.l.b16 %v2431
      %v2546 = vunpack.c.l.b16 %v2432
      %v2547 = vunpack.c.h.b16 %v2432
      %v2548 = vunpack.c.l.b16 %v2433
      %v2549 = vunpack.c.l.b16 %v2434
      %v2550 = vunpack.c.h.b16 %v2434
      %v2551 = vunpack.c.l.b16 %v2435
      %v2552 = vunpack.c.l.b16 %v2436
      %v2553 = vunpack.c.h.b16 %v2436
      %v2554 = vunpack.c.l.b16 %v2437
      %v2555 = vunpack.c.l.b16 %v2438
      %v2556 = vunpack.c.h.b16 %v2438
      %v2557 = vunpack.c.l.b16 %v2439
      %v2558 = vunpack.c.l.b16 %v2440
      %v2559 = vunpack.c.h.b16 %v2440
      %v2560 = vunpack.c.l.b16 %v2441
      %v2561 = vunpack.c.l.b16 %v2442
      %v2562 = vunpack.c.h.b16 %v2442
      %v2563 = vunpack.c.l.b16 %v2443
      %v2564 = vunpack.c.l.b16 %v2444
      %v2565 = vunpack.c.h.b16 %v2444
      %v2566 = vunpack.c.l.b16 %v2445
      %v2567 = vunpack.c.l.b16 %v2446
      %v2568 = vunpack.c.h.b16 %v2446
      %v2569 = vunpack.c.l.b16 %v2447
      %v2570 = vunpack.c.l.b16 %v2448
      %v2571 = vunpack.c.h.b16 %v2448
      %v2572 = vunpack.c.l.b16 %v2449
      %v2573 = vunpack.c.l.b16 %v2450
      %v2574 = vunpack.c.h.b16 %v2450
      %v2575 = vunpack.c.l.b16 %v2451
      %v2576 = vunpack.c.l.b16 %v2452
      %v2577 = vunpack.c.h.b16 %v2452
      %v2578 = vunpack.c.l.b16 %v2453
      %v2579 = vunpack.c.l.b16 %v2454
      %v2580 = vunpack.c.h.b16 %v2454
      %v2581 = vunpack.c.l.b16 %v2455
      %v2582 = vunpack.c.l.b16 %v2456
      %v2583 = vunpack.c.h.b16 %v2456
      %v2584 = vunpack.c.l.b16 %v2457
      %v2585 = vunpack.c.l.b16 %v2458
      %v2586 = vunpack.c.h.b16 %v2458
      %v2587 = vunpack.c.l.b16 %v2459
      %v2588 = vunpack.c.l.b16 %v2460
      %v2589 = vunpack.c.h.b16 %v2460
      %v2590 = vunpack.c.l.b16 %v2461
      %v2591 = vpack.c.b16 %v2546, %v2543
      %v2592 = vpack.c.b16 %v2547, %v2544
      %v2593 = vpack.c.b16 %v2548, %v2545
      %v2594 = vpack.c.b16 %v2552, %v2549
      %v2595 = vpack.c.b16 %v2553, %v2550
      %v2596 = vpack.c.b16 %v2554, %v2551
      %v2597 = vpack.c.b16 %v2558, %v2555
      %v2598 = vpack.c.b16 %v2559, %v2556
      %v2599 = vpack.c.b16 %v2560, %v2557
      %v2600 = vpack.c.b16 %v2564, %v2561
      %v2601 = vpack.c.b16 %v2565, %v2562
      %v2602 = vpack.c.b16 %v2566, %v2563
      %v2603 = vpack.c.b16 %v2570, %v2567
      %v2604 = vpack.c.b16 %v2571, %v2568
      %v2605 = vpack.c.b16 %v2572, %v2569
      %v2606 = vpack.c.b16 %v2576, %v2573
      %v2607 = vpack.c.b16 %v2577, %v2574
      %v2608 = vpack.c.b16 %v2578, %v2575
      %v2609 = vpack.c.b16 %v2582, %v2579
      %v2610 = vpack.c.b16 %v2583, %v2580
      %v2611 = vpack.c.b16 %v2584, %v2581
      %v2612 = vpack.c.b16 %v2588, %v2585
      %v2613 = vpack.c.b16 %v2589, %v2586
      %v2614 = vpack.c.b16 %v2590, %v2587
      %v2687 = vunpack.c.l.b16 %v2463
      %v2688 = vunpack.c.l.b16 %v2464
      %v2689 = vunpack.c.l.b16 %v2465
      %v2690 = vunpack.c.l.b16 %v2466
      %v2691 = vunpack.c.l.b16 %v2467
      %v2692 = vunpack.c.l.b16 %v2468
      %v2693 = vunpack.c.l.b16 %v2469
      %v2694 = vunpack.c.l.b16 %v2470
      %v2695 = vunpack.c.l.b16 %v2471
      %v2696 = vunpack.c.l.b16 %v2472
      %v2697 = vunpack.c.l.b16 %v2473
      %v2698 = vunpack.c.l.b16 %v2474
      %v2699 = vunpack.c.l.b16 %v2475
      %v2700 = vunpack.c.l.b16 %v2476
      %v2701 = vunpack.c.l.b16 %v2477
      %v2702 = vunpack.c.l.b16 %v2478
      %v2703 = vunpack.c.l.b16 %v2479
      %v2704 = vunpack.c.l.b16 %v2480
      %v2705 = vunpack.c.l.b16 %v2481
      %v2706 = vunpack.c.l.b16 %v2482
      %v2707 = vunpack.c.l.b16 %v2483
      %v2708 = vunpack.c.l.b16 %v2484
      %v2709 = vunpack.c.l.b16 %v2485
      %v2710 = vunpack.c.l.b16 %v2486
      %v2711 = vunpack.c.l.b16 %v2487
      %v2712 = vunpack.c.l.b16 %v2488
      %v2713 = vunpack.c.l.b16 %v2489
      %v2714 = vunpack.c.l.b16 %v2490
      %v2715 = vunpack.c.l.b16 %v2491
      %v2716 = vunpack.c.l.b16 %v2492
      %v2717 = vunpack.c.l.b16 %v2493
      %v2718 = vunpack.c.l.b16 %v2494
      %v2719 = vunpack.c.l.b16 %v2495
      %v2720 = vunpack.c.l.b16 %v2496
      %v2721 = vunpack.c.l.b16 %v2497
      %v2722 = vunpack.c.l.b16 %v2498
      %v2723 = vunpack.c.l.b16 %v2499
      %v2724 = vunpack.c.l.b16 %v2500
      %v2725 = vunpack.c.l.b16 %v2501
      %v2726 = vunpack.c.l.b16 %v2502
      %v2727 = vunpack.c.l.b16 %v2503
      %v2728 = vunpack.c.l.b16 %v2504
      %v2729 = vunpack.c.l.b16 %v2505
      %v2730 = vunpack.c.l.b16 %v2506
      %v2731 = vunpack.c.l.b16 %v2507
      %v2732 = vunpack.c.l.b16 %v2508
      %v2733 = vunpack.c.l.b16 %v2509
      %v2734 = vunpack.c.l.b16 %v2510
      %v2735 = vpack.c.b16 %v2688, %v2687
      %v2736 = vpack.c.b16 %v2690, %v2689
      %v2737 = vpack.c.b16 %v2692, %v2691
      %v2738 = vpack.c.b16 %v2694, %v2693
      %v2739 = vpack.c.b16 %v2696, %v2695
      %v2740 = vpack.c.b16 %v2698, %v2697
      %v2741 = vpack.c.b16 %v2700, %v2699
      %v2742 = vpack.c.b16 %v2702, %v2701
      %v2743 = vpack.c.b16 %v2704, %v2703
      %v2744 = vpack.c.b16 %v2706, %v2705
      %v2745 = vpack.c.b16 %v2708, %v2707
      %v2746 = vpack.c.b16 %v2710, %v2709
      %v2747 = vpack.c.b16 %v2712, %v2711
      %v2748 = vpack.c.b16 %v2714, %v2713
      %v2749 = vpack.c.b16 %v2716, %v2715
      %v2750 = vpack.c.b16 %v2718, %v2717
      %v2751 = vpack.c.b16 %v2720, %v2719
      %v2752 = vpack.c.b16 %v2722, %v2721
      %v2753 = vpack.c.b16 %v2724, %v2723
      %v2754 = vpack.c.b16 %v2726, %v2725
      %v2755 = vpack.c.b16 %v2728, %v2727
      %v2756 = vpack.c.b16 %v2730, %v2729
      %v2757 = vpack.c.b16 %v2732, %v2731
      %v2758 = vpack.c.b16 %v2734, %v2733
      %2783 = vmatprep.subr.bf16.mxu0 0
      %2784 = vmatpush1.bf16.msra.mxu0 %v2742
      %2785 = vmatprep.subr.bf16.mxu0 0
      %2786 = vmatpush1.bf16.msra.mxu0 %v2741
      %2787 = vmatprep.subr.bf16.mxu0 0
      %2788 = vmatpush1.bf16.msra.mxu0 %v2740
      %2789 = vmatprep.subr.bf16.mxu0 0
      %2790 = vmatpush1.bf16.msra.mxu0 %v2739
      %2791 = vmatprep.subr.bf16.mxu0 0
      %2792 = vmatpush1.bf16.msra.mxu0 %v2738
      %2793 = vmatprep.subr.bf16.mxu0 0
      %2794 = vmatpush1.bf16.msra.mxu0 %v2737
      %2795 = vmatprep.subr.bf16.mxu0 0
      %2796 = vmatpush1.bf16.msra.mxu0 %v2736
      %2797 = vmatprep.subr.bf16.mxu0 0
      %2798 = vmatpush1.bf16.msra.mxu0 %v2735
      %2799 = vmatprep.subr.bf16.mxu0 0
      %2800 = vmatpush2.bf16.msra.mxu0 %v2750
      %2801 = vmatprep.subr.bf16.mxu0 0
      %2802 = vmatpush2.bf16.msra.mxu0 %v2749
      %2803 = vmatprep.subr.bf16.mxu0 0
      %2804 = vmatpush2.bf16.msra.mxu0 %v2748
      %2805 = vmatprep.subr.bf16.mxu0 0
      %2806 = vmatpush2.bf16.msra.mxu0 %v2747
      %2807 = vmatprep.subr.bf16.mxu0 0
      %2808 = vmatpush2.bf16.msra.mxu0 %v2746
      %2809 = vmatprep.subr.bf16.mxu0 0
      %2810 = vmatpush2.bf16.msra.mxu0 %v2745
      %2811 = vmatprep.subr.bf16.mxu0 0
      %2812 = vmatpush2.bf16.msra.mxu0 %v2744
      %2813 = vmatprep.subr.bf16.mxu0 0
      %2814 = vmatpush2.bf16.msra.mxu0 %v2743
      %2815 = vmatprep.mubr.bf16.mxu0 %v2592
      %2816 = vmatmul.mubr.bf16.gmra.mxu0 %v2591
      %v2817 = vpop.f32.mrf.mxu0
      %v2818 = vadd.f32 0.0, %v2817
      %v2819 = vpop.f32.mrf.mxu0
      %v2820 = vpop.f32.mrf.mxu0
      %v2821 = vadd.f32 0.0, %v2820
      %v2822 = vpop.f32.mrf.mxu0
      %2823 = vmatprep.mubr.bf16.mxu0 %v2595
      %2824 = vmatmul.mubr.bf16.gmra.mxu0 %v2594
      %v2825 = vpop.f32.mrf.mxu0
      %v2826 = vadd.f32 0.0, %v2825
      %v2827 = vpop.f32.mrf.mxu0
      %v2828 = vpop.f32.mrf.mxu0
      %v2829 = vadd.f32 0.0, %v2828
      %v2830 = vpop.f32.mrf.mxu0
      %2831 = vmatprep.mubr.bf16.mxu0 %v2598
      %2832 = vmatmul.mubr.bf16.gmra.mxu0 %v2597
      %v2833 = vpop.f32.mrf.mxu0
      %v2834 = vadd.f32 0.0, %v2833
      %v2835 = vpop.f32.mrf.mxu0
      %v2836 = vpop.f32.mrf.mxu0
      %v2837 = vadd.f32 0.0, %v2836
      %v2838 = vpop.f32.mrf.mxu0
      %2839 = vmatprep.mubr.bf16.mxu0 %v2601
      %2840 = vmatmul.mubr.bf16.gmra.mxu0 %v2600
      %v2841 = vpop.f32.mrf.mxu0
      %v2842 = vadd.f32 0.0, %v2841
      %v2843 = vpop.f32.mrf.mxu0
      %v2844 = vpop.f32.mrf.mxu0
      %v2845 = vadd.f32 0.0, %v2844
      %v2846 = vpop.f32.mrf.mxu0
      %2847 = vmatprep.mubr.bf16.mxu0 %v2604
      %2848 = vmatmul.mubr.bf16.gmra.mxu0 %v2603
      %v2849 = vpop.f32.mrf.mxu0
      %v2850 = vadd.f32 0.0, %v2849
      %v2851 = vpop.f32.mrf.mxu0
      %v2852 = vpop.f32.mrf.mxu0
      %v2853 = vadd.f32 0.0, %v2852
      %v2854 = vpop.f32.mrf.mxu0
      %2855 = vmatprep.mubr.bf16.mxu0 %v2607
      %2856 = vmatmul.mubr.bf16.gmra.mxu0 %v2606
      %v2857 = vpop.f32.mrf.mxu0
      %v2858 = vadd.f32 0.0, %v2857
      %v2859 = vpop.f32.mrf.mxu0
      %v2860 = vpop.f32.mrf.mxu0
      %v2861 = vadd.f32 0.0, %v2860
      %v2862 = vpop.f32.mrf.mxu0
      %2863 = vmatprep.mubr.bf16.mxu0 %v2610
      %2864 = vmatmul.mubr.bf16.gmra.mxu0 %v2609
      %v2865 = vpop.f32.mrf.mxu0
      %v2866 = vadd.f32 0.0, %v2865
      %v2867 = vpop.f32.mrf.mxu0
      %v2868 = vpop.f32.mrf.mxu0
      %v2869 = vadd.f32 0.0, %v2868
      %v2870 = vpop.f32.mrf.mxu0
      %2871 = vmatprep.mubr.bf16.mxu0 %v2613
      %2872 = vmatmul.mubr.bf16.gmra.mxu0 %v2612
      %v2873 = vpop.f32.mrf.mxu0
      %v2874 = vadd.f32 0.0, %v2873
      %v2875 = vpop.f32.mrf.mxu0
      %v2876 = vpop.f32.mrf.mxu0
      %v2877 = vadd.f32 0.0, %v2876
      %v2878 = vpop.f32.mrf.mxu0
      %2879 = vdwg.mxu0
      %2880 = vmatprep.subr.bf16.mxu0 0
      %2881 = vmatpush1.bf16.msra.mxu0 %v2758
      %2882 = vmatprep.subr.bf16.mxu0 0
      %2883 = vmatpush1.bf16.msra.mxu0 %v2757
      %2884 = vmatprep.subr.bf16.mxu0 0
      %2885 = vmatpush1.bf16.msra.mxu0 %v2756
      %2886 = vmatprep.subr.bf16.mxu0 0
      %2887 = vmatpush1.bf16.msra.mxu0 %v2755
      %2888 = vmatprep.subr.bf16.mxu0 0
      %2889 = vmatpush1.bf16.msra.mxu0 %v2754
      %2890 = vmatprep.subr.bf16.mxu0 0
      %2891 = vmatpush1.bf16.msra.mxu0 %v2753
      %2892 = vmatprep.subr.bf16.mxu0 0
      %2893 = vmatpush1.bf16.msra.mxu0 %v2752
      %2894 = vmatprep.subr.bf16.mxu0 0
      %2895 = vmatpush1.bf16.msra.mxu0 %v2751
      %2896 = vmatprep.subr.bf16.mxu0 0
      %2897 = vmatpush2.bf16.msra.mxu0 0
      %2898 = vmatprep.subr.bf16.mxu0 0
      %2899 = vmatpush2.bf16.msra.mxu0 0
      %2900 = vmatprep.subr.bf16.mxu0 0
      %2901 = vmatpush2.bf16.msra.mxu0 0
      %2902 = vmatprep.subr.bf16.mxu0 0
      %2903 = vmatpush2.bf16.msra.mxu0 0
      %2904 = vmatprep.subr.bf16.mxu0 0
      %2905 = vmatpush2.bf16.msra.mxu0 0
      %2906 = vmatprep.subr.bf16.mxu0 0
      %2907 = vmatpush2.bf16.msra.mxu0 0
      %2908 = vmatprep.subr.bf16.mxu0 0
      %2909 = vmatpush2.bf16.msra.mxu0 0
      %2910 = vmatprep.subr.bf16.mxu0 0
      %2911 = vmatpush2.bf16.msra.mxu0 0
      %2912 = vmatprep.mubr.bf16.mxu0 0
      %2913 = vmatmul.mubr.bf16.gmra.mxu0 %v2593
      %v2914 = vpop.f32.mrf.mxu0
      %v2915 = vadd.f32 %v2818, %v2914
      %v2916 = vpop.f32.mrf.mxu0
      %v2917 = vpop.f32.mrf.mxu0
      %v2918 = vadd.f32 %v2821, %v2917
      %v2919 = vpop.f32.mrf.mxu0
      %2920 = vmatprep.mubr.bf16.mxu0 0
      %2921 = vmatmul.mubr.bf16.gmra.mxu0 %v2596
      %v2922 = vpop.f32.mrf.mxu0
      %v2923 = vadd.f32 %v2826, %v2922
      %v2924 = vpop.f32.mrf.mxu0
      %v2925 = vpop.f32.mrf.mxu0
      %v2926 = vadd.f32 %v2829, %v2925
      %v2927 = vpop.f32.mrf.mxu0
      %2928 = vmatprep.mubr.bf16.mxu0 0
      %2929 = vmatmul.mubr.bf16.gmra.mxu0 %v2599
      %v2930 = vpop.f32.mrf.mxu0
      %v2931 = vadd.f32 %v2834, %v2930
      %v2932 = vpop.f32.mrf.mxu0
      %v2933 = vpop.f32.mrf.mxu0
      %v2934 = vadd.f32 %v2837, %v2933
      %v2935 = vpop.f32.mrf.mxu0
      %2936 = vmatprep.mubr.bf16.mxu0 0
      %2937 = vmatmul.mubr.bf16.gmra.mxu0 %v2602
      %v2938 = vpop.f32.mrf.mxu0
      %v2939 = vadd.f32 %v2842, %v2938
      %v2940 = vpop.f32.mrf.mxu0
      %v2941 = vpop.f32.mrf.mxu0
      %v2942 = vadd.f32 %v2845, %v2941
      %v2943 = vpop.f32.mrf.mxu0
      %2944 = vmatprep.mubr.bf16.mxu0 0
      %2945 = vmatmul.mubr.bf16.gmra.mxu0 %v2605
      %v2946 = vpop.f32.mrf.mxu0
      %v2947 = vadd.f32 %v2850, %v2946
      %v2948 = vpop.f32.mrf.mxu0
      %v2949 = vpop.f32.mrf.mxu0
      %v2950 = vadd.f32 %v2853, %v2949
      %v2951 = vpop.f32.mrf.mxu0
      %2952 = vmatprep.mubr.bf16.mxu0 0
      %2953 = vmatmul.mubr.bf16.gmra.mxu0 %v2608
      %v2954 = vpop.f32.mrf.mxu0
      %v2955 = vadd.f32 %v2858, %v2954
      %v2956 = vpop.f32.mrf.mxu0
      %v2957 = vpop.f32.mrf.mxu0
      %v2958 = vadd.f32 %v2861, %v2957
      %v2959 = vpop.f32.mrf.mxu0
      %2960 = vmatprep.mubr.bf16.mxu0 0
      %2961 = vmatmul.mubr.bf16.gmra.mxu0 %v2611
      %v2962 = vpop.f32.mrf.mxu0
      %v2963 = vadd.f32 %v2866, %v2962
      %v2964 = vpop.f32.mrf.mxu0
      %v2965 = vpop.f32.mrf.mxu0
      %v2966 = vadd.f32 %v2869, %v2965
      %v2967 = vpop.f32.mrf.mxu0
      %2968 = vmatprep.mubr.bf16.mxu0 0
      %2969 = vmatmul.mubr.bf16.gmra.mxu0 %v2614
      %v2970 = vpop.f32.mrf.mxu0
      %v2971 = vadd.f32 %v2874, %v2970
      %v2972 = vpop.f32.mrf.mxu0
      %v2973 = vpop.f32.mrf.mxu0
      %v2974 = vadd.f32 %v2877, %v2973
      %v2975 = vpop.f32.mrf.mxu0
      %2976 = vdwg.mxu0
      %v2977 = vadd.f32 %v2368, %v2915
      %v2978 = vadd.f32 %v2371, %v2918
      %v2979 = vadd.f32 %v2376, %v2923
      %v2980 = vadd.f32 %v2379, %v2926
      %v2981 = vadd.f32 %v2384, %v2931
      %v2982 = vadd.f32 %v2387, %v2934
      %v2983 = vadd.f32 %v2392, %v2939
      %v2984 = vadd.f32 %v2395, %v2942
      %v2985 = vadd.f32 %v2400, %v2947
      %v2986 = vadd.f32 %v2403, %v2950
      %v2987 = vadd.f32 %v2408, %v2955
      %v2988 = vadd.f32 %v2411, %v2958
      %v2989 = vadd.f32 %v2416, %v2963
      %v2990 = vadd.f32 %v2419, %v2966
      %v2991 = vadd.f32 %v2424, %v2971
      %v2992 = vadd.f32 %v2427, %v2974
      %vm2993 = vcmp.ge.f32.partialorder %v2977, 0.0
      %vm2994 = vcmp.ge.f32.partialorder %v2978, 0.0
      %vm2995 = vcmp.ge.f32.partialorder %v2979, 0.0
      %vm2996 = vcmp.ge.f32.partialorder %v2980, 0.0
      %vm2997 = vcmp.ge.f32.partialorder %v2981, 0.0
      %vm2998 = vcmp.ge.f32.partialorder %v2982, 0.0
      %vm2999 = vcmp.ge.f32.partialorder %v2983, 0.0
      %vm3000 = vcmp.ge.f32.partialorder %v2984, 0.0
      %vm3001 = vcmp.ge.f32.partialorder %v2985, 0.0
      %vm3002 = vcmp.ge.f32.partialorder %v2986, 0.0
      %vm3003 = vcmp.ge.f32.partialorder %v2987, 0.0
      %vm3004 = vcmp.ge.f32.partialorder %v2988, 0.0
      %vm3005 = vcmp.ge.f32.partialorder %v2989, 0.0
      %vm3006 = vcmp.ge.f32.partialorder %v2990, 0.0
      %vm3007 = vcmp.ge.f32.partialorder %v2991, 0.0
      %vm3008 = vcmp.ge.f32.partialorder %v2992, 0.0
      %v3009 = vmul.f32 %v2977, 0.2
      %v3010 = vmul.f32 %v2978, 0.2
      %v3011 = vmul.f32 %v2979, 0.2
      %v3012 = vmul.f32 %v2980, 0.2
      %v3013 = vmul.f32 %v2981, 0.2
      %v3014 = vmul.f32 %v2982, 0.2
      %v3015 = vmul.f32 %v2983, 0.2
      %v3016 = vmul.f32 %v2984, 0.2
      %v3017 = vmul.f32 %v2985, 0.2
      %v3018 = vmul.f32 %v2986, 0.2
      %v3019 = vmul.f32 %v2987, 0.2
      %v3020 = vmul.f32 %v2988, 0.2
      %v3021 = vmul.f32 %v2989, 0.2
      %v3022 = vmul.f32 %v2990, 0.2
      %v3023 = vmul.f32 %v2991, 0.2
      %v3024 = vmul.f32 %v2992, 0.2
      %v3025 = vsel %vm2993, %v2977, %v3009
      %v3026 = vsel %vm2994, %v2978, %v3010
      %v3027 = vsel %vm2995, %v2979, %v3011
      %v3028 = vsel %vm2996, %v2980, %v3012
      %v3029 = vsel %vm2997, %v2981, %v3013
      %v3030 = vsel %vm2998, %v2982, %v3014
      %v3031 = vsel %vm2999, %v2983, %v3015
      %v3032 = vsel %vm3000, %v2984, %v3016
      %v3033 = vsel %vm3001, %v2985, %v3017
      %v3034 = vsel %vm3002, %v2986, %v3018
      %v3035 = vsel %vm3003, %v2987, %v3019
      %v3036 = vsel %vm3004, %v2988, %v3020
      %v3037 = vsel %vm3005, %v2989, %v3021
      %v3038 = vsel %vm3006, %v2990, %v3022
      %v3039 = vsel %vm3007, %v2991, %v3023
      %v3040 = vsel %vm3008, %v2992, %v3024
      %v3041 = vld [vmem:[#allocation3] sm:$0xff]
      %v3042 = vld [vmem:[#allocation3 + $0x8] sm:$0xff]
      %v3043 = vld [vmem:[#allocation3 + $0x10] sm:$0xff]
      %v3044 = vld [vmem:[#allocation3 + $0x18] sm:$0xff]
      %v3045 = vld [vmem:[#allocation3 + $0x20] sm:$0xff]
      %v3046 = vld [vmem:[#allocation3 + $0x28] sm:$0xff]
      %v3047 = vld [vmem:[#allocation3 + $0x30] sm:$0xff]
      %v3048 = vld [vmem:[#allocation3 + $0x38] sm:$0xff]
      %v3049 = vld [vmem:[#allocation3 + $0x40] sm:$0xff]
      %v3050 = vld [vmem:[#allocation3 + $0x48] sm:$0xff]
      %v3051 = vld [vmem:[#allocation3 + $0x50] sm:$0xff]
      %v3052 = vld [vmem:[#allocation3 + $0x58] sm:$0xff]
      %v3053 = vld [vmem:[#allocation3 + $0x60] sm:$0xff]
      %v3054 = vld [vmem:[#allocation3 + $0x68] sm:$0xff]
      %v3055 = vld [vmem:[#allocation3 + $0x70] sm:$0xff]
      %v3056 = vld [vmem:[#allocation3 + $0x78] sm:$0xff]
      %v3057 = vld [vmem:[%s3] sm:$0x1]
      %v3059 = vlaneseq
      %v3060 = vshrl.u32 %v3059, 7
      %v3061 = vsub.s32 0, %v3060
      %v3062 = vrot.slane %v3057, %v3061
      %v3064 = vadd.f32 %v3041, %v3062
      %v3065 = vadd.f32 %v3042, %v3062
      %v3066 = vadd.f32 %v3043, %v3062
      %v3067 = vadd.f32 %v3044, %v3062
      %v3068 = vadd.f32 %v3045, %v3062
      %v3069 = vadd.f32 %v3046, %v3062
      %v3070 = vadd.f32 %v3047, %v3062
      %v3071 = vadd.f32 %v3048, %v3062
      %v3072 = vadd.f32 %v3049, %v3062
      %v3073 = vadd.f32 %v3050, %v3062
      %v3074 = vadd.f32 %v3051, %v3062
      %v3075 = vadd.f32 %v3052, %v3062
      %v3076 = vadd.f32 %v3053, %v3062
      %v3077 = vadd.f32 %v3054, %v3062
      %v3078 = vadd.f32 %v3055, %v3062
      %v3079 = vadd.f32 %v3056, %v3062
      %s3080 = sld [smem:[#allocation4]]
      %v3081 = vstv %s3080
      %v3082 = vmul.f32 %v3081, %v3025
      %v3083 = vmul.f32 %v3081, %v3026
      %v3084 = vmul.f32 %v3081, %v3027
      %v3085 = vmul.f32 %v3081, %v3028
      %v3086 = vmul.f32 %v3081, %v3029
      %v3087 = vmul.f32 %v3081, %v3030
      %v3088 = vmul.f32 %v3081, %v3031
      %v3089 = vmul.f32 %v3081, %v3032
      %v3090 = vmul.f32 %v3081, %v3033
      %v3091 = vmul.f32 %v3081, %v3034
      %v3092 = vmul.f32 %v3081, %v3035
      %v3093 = vmul.f32 %v3081, %v3036
      %v3094 = vmul.f32 %v3081, %v3037
      %v3095 = vmul.f32 %v3081, %v3038
      %v3096 = vmul.f32 %v3081, %v3039
      %v3097 = vmul.f32 %v3081, %v3040
      %v3098 = vadd.f32 %v3064, %v3082
      %v3099 = vadd.f32 %v3065, %v3083
      %v3100 = vadd.f32 %v3066, %v3084
      %v3101 = vadd.f32 %v3067, %v3085
      %v3102 = vadd.f32 %v3068, %v3086
      %v3103 = vadd.f32 %v3069, %v3087
      %v3104 = vadd.f32 %v3070, %v3088
      %v3105 = vadd.f32 %v3071, %v3089
      %v3106 = vadd.f32 %v3072, %v3090
      %v3107 = vadd.f32 %v3073, %v3091
      %v3108 = vadd.f32 %v3074, %v3092
      %v3109 = vadd.f32 %v3075, %v3093
      %v3110 = vadd.f32 %v3076, %v3094
      %v3111 = vadd.f32 %v3077, %v3095
      %v3112 = vadd.f32 %v3078, %v3096
      %v3113 = vadd.f32 %v3079, %v3097
      %v3114 = vpack.c.bf16 %v3099, %v3098
      %v3115 = vpack.c.bf16 %v3101, %v3100
      %v3116 = vpack.c.bf16 %v3103, %v3102
      %v3117 = vpack.c.bf16 %v3105, %v3104
      %v3118 = vpack.c.bf16 %v3107, %v3106
      %v3119 = vpack.c.bf16 %v3109, %v3108
      %v3120 = vpack.c.bf16 %v3111, %v3110
      %v3121 = vpack.c.bf16 %v3113, %v3112
      %v3130 = vunpack.c.l.b16 %v3114
      %v3131 = vunpack.c.h.b16 %v3114
      %v3132 = vunpack.c.l.b16 %v3115
      %v3133 = vunpack.c.h.b16 %v3115
      %v3134 = vunpack.c.l.b16 %v3116
      %v3135 = vunpack.c.h.b16 %v3116
      %v3136 = vunpack.c.l.b16 %v3117
      %v3137 = vunpack.c.h.b16 %v3117
      %v3138 = vunpack.c.l.b16 %v3118
      %v3139 = vunpack.c.h.b16 %v3118
      %v3140 = vunpack.c.l.b16 %v3119
      %v3141 = vunpack.c.h.b16 %v3119
      %v3142 = vunpack.c.l.b16 %v3120
      %v3143 = vunpack.c.h.b16 %v3120
      %v3144 = vunpack.c.l.b16 %v3121
      %v3145 = vunpack.c.h.b16 %v3121
      %v3146 = vpack.c.b16 %v3130, %v3130
      %v3147 = vpack.c.b16 %v3131, %v3131
      %v3148 = vpack.c.b16 %v3132, %v3132
      %v3149 = vpack.c.b16 %v3133, %v3133
      %v3150 = vpack.c.b16 %v3134, %v3134
      %v3151 = vpack.c.b16 %v3135, %v3135
      %v3152 = vpack.c.b16 %v3136, %v3136
      %v3153 = vpack.c.b16 %v3137, %v3137
      %v3154 = vpack.c.b16 %v3138, %v3138
      %v3155 = vpack.c.b16 %v3139, %v3139
      %v3156 = vpack.c.b16 %v3140, %v3140
      %v3157 = vpack.c.b16 %v3141, %v3141
      %v3158 = vpack.c.b16 %v3142, %v3142
      %v3159 = vpack.c.b16 %v3143, %v3143
      %v3160 = vpack.c.b16 %v3144, %v3144
      %v3161 = vpack.c.b16 %v3145, %v3145
      %3178 = vst [vmem:[%s261] sm:$0xf] %v3146
      %3179 = vst [vmem:[%s261 + $0x4] sm:$0xf] %v3147
      %3180 = vst [vmem:[%s261 + $0x8] sm:$0xf] %v3148
      %3181 = vst [vmem:[%s261 + $0xc] sm:$0xf] %v3149
      %3182 = vst [vmem:[%s261 + $0x10] sm:$0xf] %v3150
      %3183 = vst [vmem:[%s261 + $0x14] sm:$0xf] %v3151
      %3184 = vst [vmem:[%s261 + $0x18] sm:$0xf] %v3152
      %3185 = vst [vmem:[%s261 + $0x1c] sm:$0xf] %v3153
      %3186 = vst [vmem:[%s261 + $0x20] sm:$0xf] %v3154
      %3187 = vst [vmem:[%s261 + $0x24] sm:$0xf] %v3155
      %3188 = vst [vmem:[%s261 + $0x28] sm:$0xf] %v3156
      %3189 = vst [vmem:[%s261 + $0x2c] sm:$0xf] %v3157
      %3190 = vst [vmem:[%s261 + $0x30] sm:$0xf] %v3158
      %3191 = vst [vmem:[%s261 + $0x34] sm:$0xf] %v3159
      %3192 = vst [vmem:[%s261 + $0x38] sm:$0xf] %v3160
      %3193 = vst [vmem:[%s261 + $0x3c] sm:$0xf] %v3161
      %s3194 = smul.u32 16, %s22
      %p3195 = scmp.lt.s32.totalorder %s21, 1
      %s3196 = scalar_select %p3195, %s21, 1
      %p3197 = scmp.lt.s32.totalorder %s3194, 15
      %s3198 = scalar_select %p3197, %s3194, 15
      %s3199 = smul.addr %s3196, 16
      %s3200 = sadd.s32 %s3198, %s3199
      %s3201 = smul.addr %s3200, 4
      %s3202 = scalar_lea.vmem %s5, %s3201
      // Predicated region
      $region45: #{resD_forward.1} parent=39 // pred_check
        %p3203 = pneg %p161
      $region46: #{resD_forward.1} parent=39 // pred_check_branch
        %3205 = sbr.rel (%p3203) target = $region48
      $region47: #{resD_forward.1} parent=39 // pred_region
        %s3206 = smul.u32 16, %s22
      $region48: #{resD_forward.1} parent=39 // pred_fallthru
        _
    $region40: #{resD_forward.1} parent=5 // pred_fallthru
      _
    %p3207 = scmp.le.s32.totalorder 2, %s12
    // Predicated region
    $region49: #{resD_forward.1} parent=5 // pred_check
      %p3208 = pneg %p3207
    $region50: #{resD_forward.1} parent=5 // pred_check_branch
      %3210 = sbr.rel (%p3208) target = $region52
    $region51: #{resD_forward.1} parent=5 // pred_region
      %s3211 = ssub.s32 %s12, 2
      // Predicated region
      $region53: #{resD_forward.1} parent=51 // pred_check
        %p3212 = pneg %p167
      $region54: #{resD_forward.1} parent=51 // pred_check_branch
        %3214 = sbr.rel (%p3212) target = $region56
      $region55: #{resD_forward.1} parent=51 // pred_region
        %s3215 = smul.u32 16, %s24
        %p3216 = scmp.lt.s32.totalorder %s23, 1
        %s3217 = scalar_select %p3216, %s23, 1
        %p3218 = scmp.lt.s32.totalorder %s3215, 15
        %s3219 = scalar_select %p3218, %s3215, 15
        %s3220 = smul.addr %s3217, 16
        %s3221 = sadd.s32 %s3219, %s3220
        %s3222 = smul.addr %s3221, 4
        %s3223 = scalar_lea.vmem %s5, %s3222
      $region56: #{resD_forward.1} parent=51 // pred_fallthru
        _
    $region52: #{resD_forward.1} parent=5 // pred_fallthru
      _
  $region6: #{resD_forward.1} parent=0 // loop_footer
    %s16 = sadd.s32 1, %s12
  $region7: #{resD_forward.1} parent=0 // loop_footer_branch
    %11 = sbr.rel target = $region3
  $region8: #{resD_forward.1} parent=0 // loop_exit
    _

</llo_original>
